<compile_context>
chip_gen: v7x
topology: tpu7x:2x2x1
jax: 0.10.0
libtpu: 0.0.40
codegen_flags: <defaults>
</compile_context>

<pallas_src>
import jax
import jax.numpy as jnp
from jax.experimental import pallas as pl
from jax.experimental.pallas import tpu as pltpu

# ---- model configuration ----
DIM_IN = 16
HIDDEN = 32
DIM_OUT = 8
NUM_BLOCKS = 2          # num_hidden_layers = 2 * NUM_BLOCKS

# ---- demo configuration ----
BATCH = 1024            # demo rows (one lane-dense grid step)


def _mish_fast(x):
    """mish(x) = x * tanh(softplus(x)) = x * n / (n + 2),  n = e*(e+2), e = exp(x).

    One exp + one EUP approx-reciprocal per call.  The exp argument is clamped
    at 20: for x >= 20, tanh(softplus(x)) == 1 to f32 precision, so the clamp
    is exact and avoids inf intermediates.  All math stays in f32.
    """
    e = jnp.exp(jnp.minimum(x, 20.0))
    n = e * (e + 2.0)
    return x * n * pl.reciprocal(n + 2.0, approx=True)


def residual_mlp_kernel(x_ref, w_in_ref, b_in_ref,
                        w1s_ref, b1s_ref, w2s_ref, b2s_ref,
                        w_out_ref, b_out_ref, o_ref):
    # Transposed layout: x_ref is (DIM_IN, TB) bf16, weights are torch-layout
    # (out, in) bf16, biases are (out, 1) f32.  Batch is the lane dimension,
    # so every element-wise op below runs at full 128-lane density.
    h = jnp.dot(w_in_ref[...], x_ref[...],
                preferred_element_type=jnp.float32) + b_in_ref[...]

    # Pre-activation residual blocks (fully unrolled; weights VMEM-resident).
    for i in range(NUM_BLOCKS):
        h_in = h
        t = _mish_fast(h)
        t = jnp.dot(w1s_ref[i], t.astype(jnp.bfloat16),
                    preferred_element_type=jnp.float32) + b1s_ref[i]
        t = _mish_fast(t)
        t = jnp.dot(w2s_ref[i], t.astype(jnp.bfloat16),
                    preferred_element_type=jnp.float32) + b2s_ref[i]
        h = t + h_in

    # Output projection -> (DIM_OUT, TB): lane-dense store, no padding.
    out = jnp.dot(w_out_ref[...], h.astype(jnp.bfloat16),
                  preferred_element_type=jnp.float32) + b_out_ref[...]
    o_ref[...] = out.astype(o_ref.dtype)


def residual_mlp(x, params, *, max_batch_tile=4096, min_steps=1):
    """Forward pass.  x: (batch, DIM_IN) f32 -> (batch, DIM_OUT) f32.

    min_steps=1 is right for single-TensorCore chips (v5e/v6e).  On v7x pass
    min_steps=2 so the "parallel" batch grid axis gives each TensorCore one
    large chunk.
    """
    (w_in, b_in, w1s, b1s, w2s, b2s, w_out, b_out) = params
    batch = x.shape[0]

    # Few, large grid steps: per-step overhead (~0.35us) dominates this kernel.
    n_steps = max(min_steps, pl.cdiv(batch, max_batch_tile))
    if n_steps == 1:
        batch_tile = batch
    else:
        batch_tile = pl.cdiv(pl.cdiv(batch, n_steps), 128) * 128  # lane-aligned
        n_steps = pl.cdiv(batch, batch_tile)
    batch_padded = n_steps * batch_tile
    if batch_padded != batch:
        # Only hit when batch does not tile evenly (never for the demo batch).
        x = jnp.pad(x, ((0, batch_padded - batch), (0, 0)))

    # Transposed bf16 input: (DIM_IN, batch); batch is the lane dim.
    x_t = x.astype(jnp.bfloat16).T

    # bf16 weights for the MXU; biases stay f32 (element-wise math is f32).
    w_in_b = w_in.astype(jnp.bfloat16)
    w1s_b = w1s.astype(jnp.bfloat16)
    w2s_b = w2s.astype(jnp.bfloat16)
    w_out_b = w_out.astype(jnp.bfloat16)

    # Constant index_map -> weight/bias tiles DMA'd once, VMEM-resident.
    def const_spec(*blk):
        n = len(blk)
        return pl.BlockSpec(blk, lambda i, n=n: (0,) * n)

    weight_specs = [
        const_spec(HIDDEN, DIM_IN),                 # w_in  (out, in)
        const_spec(HIDDEN, 1),                      # b_in  (out, 1)
        const_spec(NUM_BLOCKS, HIDDEN, HIDDEN),     # w1s
        const_spec(NUM_BLOCKS, HIDDEN, 1),          # b1s
        const_spec(NUM_BLOCKS, HIDDEN, HIDDEN),     # w2s
        const_spec(NUM_BLOCKS, HIDDEN, 1),          # b2s
        const_spec(DIM_OUT, HIDDEN),                # w_out
        const_spec(DIM_OUT, 1),                     # b_out
    ]

    # Advisory cost estimate (matches the real narrow-output traffic).
    flops = 2 * batch_padded * (DIM_IN * HIDDEN
                                + 2 * NUM_BLOCKS * HIDDEN * HIDDEN
                                + HIDDEN * DIM_OUT)
    transcendentals = 2 * 2 * NUM_BLOCKS * batch_padded * HIDDEN  # exp + rcp per mish
    weight_bytes = sum(int(a.size) * a.dtype.itemsize
                       for a in (w_in_b, b_in, w1s_b, b1s, w2s_b, b2s,
                                 w_out_b, b_out))
    bytes_accessed = (int(x_t.size) * x_t.dtype.itemsize
                      + weight_bytes
                      + batch_padded * DIM_OUT * 4)

    out_t = pl.pallas_call(
        residual_mlp_kernel,
        out_shape=jax.ShapeDtypeStruct((DIM_OUT, batch_padded), jnp.float32),
        grid=(n_steps,),
        in_specs=[pl.BlockSpec((DIM_IN, batch_tile), lambda i: (0, i))]
                 + weight_specs,
        out_specs=pl.BlockSpec((DIM_OUT, batch_tile), lambda i: (0, i)),
        compiler_params=pltpu.CompilerParams(
            dimension_semantics=("parallel",)),   # batch axis shardable across TCs
        cost_estimate=pl.CostEstimate(flops=flops,
                                      transcendentals=transcendentals,
                                      bytes_accessed=bytes_accessed),
    )(x_t, w_in_b, b_in, w1s_b, b1s, w2s_b, b2s, w_out_b, b_out)

    if batch_padded != batch:
        out_t = out_t[:, :batch]
    return out_t.T


def init_params(key):
    """Deterministic init mimicking torch.nn.Linear default U(-1/sqrt(fan_in), +...).

    Weights are stored in torch layout (out_features, in_features); biases as
    (out_features, 1) -- exactly what the transposed kernel consumes.
    """
    ks = jax.random.split(key, 4 + 4 * NUM_BLOCKS)

    def linear(kw, kb, fan_in, fan_out):
        bound = 1.0 / jnp.sqrt(fan_in)
        w = jax.random.uniform(kw, (fan_out, fan_in), jnp.float32, -bound, bound)
        b = jax.random.uniform(kb, (fan_out, 1), jnp.float32, -bound, bound)
        return w, b

    w_in, b_in = linear(ks[0], ks[1], DIM_IN, HIDDEN)
    w1s, b1s, w2s, b2s = [], [], [], []
    for i in range(NUM_BLOCKS):
        w1, b1 = linear(ks[4 + 4 * i], ks[5 + 4 * i], HIDDEN, HIDDEN)
        w2, b2 = linear(ks[6 + 4 * i], ks[7 + 4 * i], HIDDEN, HIDDEN)
        w1s.append(w1); b1s.append(b1); w2s.append(w2); b2s.append(b2)
    w_out, b_out = linear(ks[2], ks[3], HIDDEN, DIM_OUT)

    return (w_in, b_in,
            jnp.stack(w1s), jnp.stack(b1s),
            jnp.stack(w2s), jnp.stack(b2s),
            w_out, b_out)


def residual_mlp_reference(x, params):
    """Plain-JAX f32 reference of the exact PyTorch forward semantics."""
    (w_in, b_in, w1s, b1s, w2s, b2s, w_out, b_out) = params

    def mish(v):
        return v * jnp.tanh(jax.nn.softplus(v))

    def lin(v, w, b):           # torch layout: y = v @ W^T + b
        return v @ w.T + b[:, 0]

    h = lin(x, w_in, b_in)
    for i in range(NUM_BLOCKS):
        h_in = h
        t = lin(mish(h), w1s[i], b1s[i])
        t = lin(mish(t), w2s[i], b2s[i])
        h = t + h_in
    return lin(h, w_out, b_out)


if __name__ == "__main__":
    key = jax.random.PRNGKey(0)
    kx, kp = jax.random.split(key)
    x = jax.random.normal(kx, (BATCH, DIM_IN), jnp.float32)
    params = init_params(kp)

    out = jax.block_until_ready(residual_mlp(x, params))
    ref = residual_mlp_reference(x, params)

    assert out.shape == (BATCH, DIM_OUT)
    # bf16 MXU inputs + approx-reciprocal Mish => moderate tolerance vs the
    # exact f32 reference (inference-grade precision).
    max_err = jnp.max(jnp.abs(out - ref))
    assert jnp.allclose(out, ref, atol=5e-2, rtol=5e-2), \
        f"mismatch vs reference: max abs err {max_err}"

    print("KERNEL_OK")
</pallas_src>

<mosaic_0001>
module attributes {stable_mosaic.version = 11 : i64} {
  func.func @residual_mlp_kernel(%arg0: i32, %arg1: memref<16x1024xbf16, #tpu.memory_space<vmem>>, %arg2: memref<32x16xbf16, #tpu.memory_space<vmem>>, %arg3: memref<32x1xf32, #tpu.memory_space<vmem>>, %arg4: memref<2x32x32xbf16, #tpu.memory_space<vmem>>, %arg5: memref<2x32x1xf32, #tpu.memory_space<vmem>>, %arg6: memref<2x32x32xbf16, #tpu.memory_space<vmem>>, %arg7: memref<2x32x1xf32, #tpu.memory_space<vmem>>, %arg8: memref<8x32xbf16, #tpu.memory_space<vmem>>, %arg9: memref<8x1xf32, #tpu.memory_space<vmem>>, %arg10: memref<8x1024xf32, #tpu.memory_space<vmem>>) attributes {dimension_semantics = [#tpu.dimension_semantics<parallel>], iteration_bounds = array<i64: 1>, scalar_prefetch = 0 : i64, scratch_operands = 0 : i64, tpu.core_type = #tpu.core_type<tc>, window_params = [{transform_indices = @transform_0, window_bounds = array<i64: 16, 1024>}, {pipeline_mode = #tpu.pipeline_mode<synchronous>, transform_indices = @transform_1, window_bounds = array<i64: 32, 16>}, {pipeline_mode = #tpu.pipeline_mode<synchronous>, transform_indices = @transform_2, window_bounds = array<i64: 32, 1>}, {pipeline_mode = #tpu.pipeline_mode<synchronous>, transform_indices = @transform_3, window_bounds = array<i64: 2, 32, 32>}, {pipeline_mode = #tpu.pipeline_mode<synchronous>, transform_indices = @transform_4, window_bounds = array<i64: 2, 32, 1>}, {pipeline_mode = #tpu.pipeline_mode<synchronous>, transform_indices = @transform_5, window_bounds = array<i64: 2, 32, 32>}, {pipeline_mode = #tpu.pipeline_mode<synchronous>, transform_indices = @transform_6, window_bounds = array<i64: 2, 32, 1>}, {pipeline_mode = #tpu.pipeline_mode<synchronous>, transform_indices = @transform_7, window_bounds = array<i64: 8, 32>}, {pipeline_mode = #tpu.pipeline_mode<synchronous>, transform_indices = @transform_8, window_bounds = array<i64: 8, 1>}, {transform_indices = @transform_9, window_bounds = array<i64: 8, 1024>}]} {
    %c0 = arith.constant 0 : index
    %c0_0 = arith.constant 0 : index
    %0 = vector.load %arg2[%c0, %c0_0] : memref<32x16xbf16, #tpu.memory_space<vmem>>, vector<32x16xbf16>
    %c0_1 = arith.constant 0 : index
    %c0_2 = arith.constant 0 : index
    %1 = vector.load %arg1[%c0_1, %c0_2] : memref<16x1024xbf16, #tpu.memory_space<vmem>>, vector<16x1024xbf16>
    %cst = arith.constant dense<0.000000e+00> : vector<32x1024xf32>
    %2 = tpu.matmul %0, %1, %cst {dimension_numbers = #tpu.dot_dimension_numbers<[1], [0], [0], [1], [0, 0, 1, 1], [], []>} : vector<32x16xbf16>, vector<16x1024xbf16>, vector<32x1024xf32> -> vector<32x1024xf32>
    %c0_3 = arith.constant 0 : index
    %c0_4 = arith.constant 0 : index
    %3 = vector.load %arg3[%c0_3, %c0_4] : memref<32x1xf32, #tpu.memory_space<vmem>>, vector<32x1xf32>
    %4 = vector.broadcast %3 : vector<32x1xf32> to vector<32x1024xf32>
    %5 = arith.addf %2, %4 : vector<32x1024xf32>
    %cst_5 = arith.constant 2.000000e+01 : f32
    %6 = vector.broadcast %cst_5 : f32 to vector<32x1024xf32>
    %7 = arith.minimumf %5, %6 : vector<32x1024xf32>
    %8 = math.exp %7 : vector<32x1024xf32>
    %cst_6 = arith.constant 2.000000e+00 : f32
    %9 = vector.broadcast %cst_6 : f32 to vector<32x1024xf32>
    %10 = arith.addf %8, %9 : vector<32x1024xf32>
    %11 = arith.mulf %8, %10 : vector<32x1024xf32>
    %12 = arith.mulf %5, %11 : vector<32x1024xf32>
    %cst_7 = arith.constant 2.000000e+00 : f32
    %13 = vector.broadcast %cst_7 : f32 to vector<32x1024xf32>
    %14 = arith.addf %11, %13 : vector<32x1024xf32>
    %15 = tpu.reciprocal %14 {approx = true} : vector<32x1024xf32> -> vector<32x1024xf32>
    %16 = arith.mulf %12, %15 : vector<32x1024xf32>
    %c0_8 = arith.constant 0 : index
    %c0_9 = arith.constant 0 : index
    %c0_10 = arith.constant 0 : index
    %17 = vector.load %arg4[%c0_8, %c0_9, %c0_10] : memref<2x32x32xbf16, #tpu.memory_space<vmem>>, vector<1x32x32xbf16>
    %18 = vector.shape_cast %17 : vector<1x32x32xbf16> to vector<32x32xbf16>
    %19 = arith.truncf %16 : vector<32x1024xf32> to vector<32x1024xbf16>
    %cst_11 = arith.constant dense<0.000000e+00> : vector<32x1024xf32>
    %20 = tpu.matmul %18, %19, %cst_11 {dimension_numbers = #tpu.dot_dimension_numbers<[1], [0], [0], [1], [0, 0, 1, 1], [], []>} : vector<32x32xbf16>, vector<32x1024xbf16>, vector<32x1024xf32> -> vector<32x1024xf32>
    %c0_12 = arith.constant 0 : index
    %c0_13 = arith.constant 0 : index
    %c0_14 = arith.constant 0 : index
    %21 = vector.load %arg5[%c0_12, %c0_13, %c0_14] : memref<2x32x1xf32, #tpu.memory_space<vmem>>, vector<1x32x1xf32>
    %22 = vector.shape_cast %21 : vector<1x32x1xf32> to vector<32x1xf32>
    %23 = vector.broadcast %22 : vector<32x1xf32> to vector<32x1024xf32>
    %24 = arith.addf %20, %23 : vector<32x1024xf32>
    %cst_15 = arith.constant 2.000000e+01 : f32
    %25 = vector.broadcast %cst_15 : f32 to vector<32x1024xf32>
    %26 = arith.minimumf %24, %25 : vector<32x1024xf32>
    %27 = math.exp %26 : vector<32x1024xf32>
    %cst_16 = arith.constant 2.000000e+00 : f32
    %28 = vector.broadcast %cst_16 : f32 to vector<32x1024xf32>
    %29 = arith.addf %27, %28 : vector<32x1024xf32>
    %30 = arith.mulf %27, %29 : vector<32x1024xf32>
    %31 = arith.mulf %24, %30 : vector<32x1024xf32>
    %cst_17 = arith.constant 2.000000e+00 : f32
    %32 = vector.broadcast %cst_17 : f32 to vector<32x1024xf32>
    %33 = arith.addf %30, %32 : vector<32x1024xf32>
    %34 = tpu.reciprocal %33 {approx = true} : vector<32x1024xf32> -> vector<32x1024xf32>
    %35 = arith.mulf %31, %34 : vector<32x1024xf32>
    %c0_18 = arith.constant 0 : index
    %c0_19 = arith.constant 0 : index
    %c0_20 = arith.constant 0 : index
    %36 = vector.load %arg6[%c0_18, %c0_19, %c0_20] : memref<2x32x32xbf16, #tpu.memory_space<vmem>>, vector<1x32x32xbf16>
    %37 = vector.shape_cast %36 : vector<1x32x32xbf16> to vector<32x32xbf16>
    %38 = arith.truncf %35 : vector<32x1024xf32> to vector<32x1024xbf16>
    %cst_21 = arith.constant dense<0.000000e+00> : vector<32x1024xf32>
    %39 = tpu.matmul %37, %38, %cst_21 {dimension_numbers = #tpu.dot_dimension_numbers<[1], [0], [0], [1], [0, 0, 1, 1], [], []>} : vector<32x32xbf16>, vector<32x1024xbf16>, vector<32x1024xf32> -> vector<32x1024xf32>
    %c0_22 = arith.constant 0 : index
    %c0_23 = arith.constant 0 : index
    %c0_24 = arith.constant 0 : index
    %40 = vector.load %arg7[%c0_22, %c0_23, %c0_24] : memref<2x32x1xf32, #tpu.memory_space<vmem>>, vector<1x32x1xf32>
    %41 = vector.shape_cast %40 : vector<1x32x1xf32> to vector<32x1xf32>
    %42 = vector.broadcast %41 : vector<32x1xf32> to vector<32x1024xf32>
    %43 = arith.addf %39, %42 : vector<32x1024xf32>
    %44 = arith.addf %43, %5 : vector<32x1024xf32>
    %cst_25 = arith.constant 2.000000e+01 : f32
    %45 = vector.broadcast %cst_25 : f32 to vector<32x1024xf32>
    %46 = arith.minimumf %44, %45 : vector<32x1024xf32>
    %47 = math.exp %46 : vector<32x1024xf32>
    %cst_26 = arith.constant 2.000000e+00 : f32
    %48 = vector.broadcast %cst_26 : f32 to vector<32x1024xf32>
    %49 = arith.addf %47, %48 : vector<32x1024xf32>
    %50 = arith.mulf %47, %49 : vector<32x1024xf32>
    %51 = arith.mulf %44, %50 : vector<32x1024xf32>
    %cst_27 = arith.constant 2.000000e+00 : f32
    %52 = vector.broadcast %cst_27 : f32 to vector<32x1024xf32>
    %53 = arith.addf %50, %52 : vector<32x1024xf32>
    %54 = tpu.reciprocal %53 {approx = true} : vector<32x1024xf32> -> vector<32x1024xf32>
    %55 = arith.mulf %51, %54 : vector<32x1024xf32>
    %c1 = arith.constant 1 : index
    %c0_28 = arith.constant 0 : index
    %c0_29 = arith.constant 0 : index
    %56 = vector.load %arg4[%c1, %c0_28, %c0_29] : memref<2x32x32xbf16, #tpu.memory_space<vmem>>, vector<1x32x32xbf16>
    %57 = vector.shape_cast %56 : vector<1x32x32xbf16> to vector<32x32xbf16>
    %58 = arith.truncf %55 : vector<32x1024xf32> to vector<32x1024xbf16>
    %cst_30 = arith.constant dense<0.000000e+00> : vector<32x1024xf32>
    %59 = tpu.matmul %57, %58, %cst_30 {dimension_numbers = #tpu.dot_dimension_numbers<[1], [0], [0], [1], [0, 0, 1, 1], [], []>} : vector<32x32xbf16>, vector<32x1024xbf16>, vector<32x1024xf32> -> vector<32x1024xf32>
    %c1_31 = arith.constant 1 : index
    %c0_32 = arith.constant 0 : index
    %c0_33 = arith.constant 0 : index
    %60 = vector.load %arg5[%c1_31, %c0_32, %c0_33] : memref<2x32x1xf32, #tpu.memory_space<vmem>>, vector<1x32x1xf32>
    %61 = vector.shape_cast %60 : vector<1x32x1xf32> to vector<32x1xf32>
    %62 = vector.broadcast %61 : vector<32x1xf32> to vector<32x1024xf32>
    %63 = arith.addf %59, %62 : vector<32x1024xf32>
    %cst_34 = arith.constant 2.000000e+01 : f32
    %64 = vector.broadcast %cst_34 : f32 to vector<32x1024xf32>
    %65 = arith.minimumf %63, %64 : vector<32x1024xf32>
    %66 = math.exp %65 : vector<32x1024xf32>
    %cst_35 = arith.constant 2.000000e+00 : f32
    %67 = vector.broadcast %cst_35 : f32 to vector<32x1024xf32>
    %68 = arith.addf %66, %67 : vector<32x1024xf32>
    %69 = arith.mulf %66, %68 : vector<32x1024xf32>
    %70 = arith.mulf %63, %69 : vector<32x1024xf32>
    %cst_36 = arith.constant 2.000000e+00 : f32
    %71 = vector.broadcast %cst_36 : f32 to vector<32x1024xf32>
    %72 = arith.addf %69, %71 : vector<32x1024xf32>
    %73 = tpu.reciprocal %72 {approx = true} : vector<32x1024xf32> -> vector<32x1024xf32>
    %74 = arith.mulf %70, %73 : vector<32x1024xf32>
    %c1_37 = arith.constant 1 : index
    %c0_38 = arith.constant 0 : index
    %c0_39 = arith.constant 0 : index
    %75 = vector.load %arg6[%c1_37, %c0_38, %c0_39] : memref<2x32x32xbf16, #tpu.memory_space<vmem>>, vector<1x32x32xbf16>
    %76 = vector.shape_cast %75 : vector<1x32x32xbf16> to vector<32x32xbf16>
    %77 = arith.truncf %74 : vector<32x1024xf32> to vector<32x1024xbf16>
    %cst_40 = arith.constant dense<0.000000e+00> : vector<32x1024xf32>
    %78 = tpu.matmul %76, %77, %cst_40 {dimension_numbers = #tpu.dot_dimension_numbers<[1], [0], [0], [1], [0, 0, 1, 1], [], []>} : vector<32x32xbf16>, vector<32x1024xbf16>, vector<32x1024xf32> -> vector<32x1024xf32>
    %c1_41 = arith.constant 1 : index
    %c0_42 = arith.constant 0 : index
    %c0_43 = arith.constant 0 : index
    %79 = vector.load %arg7[%c1_41, %c0_42, %c0_43] : memref<2x32x1xf32, #tpu.memory_space<vmem>>, vector<1x32x1xf32>
    %80 = vector.shape_cast %79 : vector<1x32x1xf32> to vector<32x1xf32>
    %81 = vector.broadcast %80 : vector<32x1xf32> to vector<32x1024xf32>
    %82 = arith.addf %78, %81 : vector<32x1024xf32>
    %83 = arith.addf %82, %44 : vector<32x1024xf32>
    %c0_44 = arith.constant 0 : index
    %c0_45 = arith.constant 0 : index
    %84 = vector.load %arg8[%c0_44, %c0_45] : memref<8x32xbf16, #tpu.memory_space<vmem>>, vector<8x32xbf16>
    %85 = arith.truncf %83 : vector<32x1024xf32> to vector<32x1024xbf16>
    %cst_46 = arith.constant dense<0.000000e+00> : vector<8x1024xf32>
    %86 = tpu.matmul %84, %85, %cst_46 {dimension_numbers = #tpu.dot_dimension_numbers<[1], [0], [0], [1], [0, 0, 1, 1], [], []>} : vector<8x32xbf16>, vector<32x1024xbf16>, vector<8x1024xf32> -> vector<8x1024xf32>
    %c0_47 = arith.constant 0 : index
    %c0_48 = arith.constant 0 : index
    %87 = vector.load %arg9[%c0_47, %c0_48] : memref<8x1xf32, #tpu.memory_space<vmem>>, vector<8x1xf32>
    %88 = vector.broadcast %87 : vector<8x1xf32> to vector<8x1024xf32>
    %89 = arith.addf %86, %88 : vector<8x1024xf32>
    %c0_49 = arith.constant 0 : index
    %c0_50 = arith.constant 0 : index
    %90 = vector.load %arg10[%c0_49, %c0_50] : memref<8x1024xf32, #tpu.memory_space<vmem>>, vector<8x1024xf32>
    tpu.vector_store %arg10[%c0_49, %c0_50], %89 {strides = array<i32>} : memref<8x1024xf32, #tpu.memory_space<vmem>>, vector<8x1024xf32>,
    return
  }
  func.func @transform_0(%arg0: i32) -> (i32, i32) {
    %c0_i32 = arith.constant 0 : i32
    %c0_i32_0 = arith.constant 0 : i32
    return %c0_i32, %arg0 : i32, i32
  }
  func.func @transform_1(%arg0: i32) -> (i32, i32) {
    %c0_i32 = arith.constant 0 : i32
    %c0_i32_0 = arith.constant 0 : i32
    %c0_i32_1 = arith.constant 0 : i32
    return %c0_i32, %c0_i32_0 : i32, i32
  }
  func.func @transform_2(%arg0: i32) -> (i32, i32) {
    %c0_i32 = arith.constant 0 : i32
    %c0_i32_0 = arith.constant 0 : i32
    %c0_i32_1 = arith.constant 0 : i32
    return %c0_i32, %c0_i32_0 : i32, i32
  }
  func.func @transform_3(%arg0: i32) -> (i32, i32, i32) {
    %c0_i32 = arith.constant 0 : i32
    %c0_i32_0 = arith.constant 0 : i32
    %c0_i32_1 = arith.constant 0 : i32
    %c0_i32_2 = arith.constant 0 : i32
    return %c0_i32, %c0_i32_0, %c0_i32_1 : i32, i32, i32
  }
  func.func @transform_4(%arg0: i32) -> (i32, i32, i32) {
    %c0_i32 = arith.constant 0 : i32
    %c0_i32_0 = arith.constant 0 : i32
    %c0_i32_1 = arith.constant 0 : i32
    %c0_i32_2 = arith.constant 0 : i32
    return %c0_i32, %c0_i32_0, %c0_i32_1 : i32, i32, i32
  }
  func.func @transform_5(%arg0: i32) -> (i32, i32, i32) {
    %c0_i32 = arith.constant 0 : i32
    %c0_i32_0 = arith.constant 0 : i32
    %c0_i32_1 = arith.constant 0 : i32
    %c0_i32_2 = arith.constant 0 : i32
    return %c0_i32, %c0_i32_0, %c0_i32_1 : i32, i32, i32
  }
  func.func @transform_6(%arg0: i32) -> (i32, i32, i32) {
    %c0_i32 = arith.constant 0 : i32
    %c0_i32_0 = arith.constant 0 : i32
    %c0_i32_1 = arith.constant 0 : i32
    %c0_i32_2 = arith.constant 0 : i32
    return %c0_i32, %c0_i32_0, %c0_i32_1 : i32, i32, i32
  }
  func.func @transform_7(%arg0: i32) -> (i32, i32) {
    %c0_i32 = arith.constant 0 : i32
    %c0_i32_0 = arith.constant 0 : i32
    %c0_i32_1 = arith.constant 0 : i32
    return %c0_i32, %c0_i32_0 : i32, i32
  }
  func.func @transform_8(%arg0: i32) -> (i32, i32) {
    %c0_i32 = arith.constant 0 : i32
    %c0_i32_0 = arith.constant 0 : i32
    %c0_i32_1 = arith.constant 0 : i32
    return %c0_i32, %c0_i32_0 : i32, i32
  }
  func.func @transform_9(%arg0: i32) -> (i32, i32) {
    %c0_i32 = arith.constant 0 : i32
    %c0_i32_0 = arith.constant 0 : i32
    return %c0_i32, %arg0 : i32, i32
  }
}

</mosaic_0001>

<llo_original>
// kernel: tpu_custom_call.1
$region0: #{tpu_custom_call.1}
  #allocation0 [shape = 'u32[]', space=smem, size = 0x4, offset = 0x4, fixed_abs, tag = 'smem constant byte address 0x4 - core index']
  #allocation1 [shape = 'u32[144,128]{1,0:T(1,128)}', space=vmem, size = 0x12000, scoped, tag = 'internal scratch']
  %s0 = inlined_call_operand.vmem [shape: bf16[16,1024], index: 0, kind: input, shape index: {}]
  %s1 = inlined_call_operand.vmem [shape: bf16[32,16], index: 1, kind: input, shape index: {}]
  %s2 = inlined_call_operand.vmem [shape: f32[32,1], index: 2, kind: input, shape index: {}]
  %s3 = inlined_call_operand.vmem [shape: bf16[2,32,32], index: 3, kind: input, shape index: {}]
  %s4 = inlined_call_operand.vmem [shape: f32[2,32,1], index: 4, kind: input, shape index: {}]
  %s5 = inlined_call_operand.vmem [shape: bf16[2,32,32], index: 5, kind: input, shape index: {}]
  %s6 = inlined_call_operand.vmem [shape: f32[2,32,1], index: 6, kind: input, shape index: {}]
  %s7 = inlined_call_operand.vmem [shape: bf16[8,32], index: 7, kind: input, shape index: {}]
  %s8 = inlined_call_operand.vmem [shape: f32[8,1], index: 8, kind: input, shape index: {}]
  %s9 = inlined_call_operand.hbm [shape: f32[8,1024], index: 9, kind: output, shape index: {}]
  %s10 = sld [smem:[#allocation0]]
  $region46: #{tpu_custom_call.1} parent=0
    _
  %s12 = ssub.s32 1, %s10
  %s13 = scalar_select 0, %s12, %s10
  $region1: #{tpu_custom_call.1} parent=0
    #allocation2 [shape = 'u8[32768]{0}', space=vmem, size = 0x8000, scoped, tag = 'output window, operand 0, single buffered']
    #allocation3 [shape = 's32[1]{0}', space=sflag, size = 0x4, scoped, tag = 'scoped memory for tpu_custom_call.1']
    %14 = vsyncpa [#allocation3], 0
    // Predicated region
    $region2: #{tpu_custom_call.1} parent=1 // pred_check
      _
    $region3: #{tpu_custom_call.1} parent=1 // pred_check_branch
      %16 = sbr.rel (0) target = $region5
    $region4: #{tpu_custom_call.1} parent=1 // pred_region
      _
    $region5: #{tpu_custom_call.1} parent=1 // pred_fallthru
      _
    // Predicated region
    $region6: #{tpu_custom_call.1} parent=1 // pred_check
      _
    $region7: #{tpu_custom_call.1} parent=1 // pred_check_branch
      %18 = sbr.rel (0) target = $region9
    $region8: #{tpu_custom_call.1} parent=1 // pred_region
      _
    $region9: #{tpu_custom_call.1} parent=1 // pred_fallthru
      _
    // Predicated region
    $region10: #{tpu_custom_call.1} parent=1 // pred_check
      _
    $region11: #{tpu_custom_call.1} parent=1 // pred_check_branch
      %20 = sbr.rel (0) target = $region13
    $region12: #{tpu_custom_call.1} parent=1 // pred_region
      _
    $region13: #{tpu_custom_call.1} parent=1 // pred_fallthru
      _
    // Predicated region
    $region14: #{tpu_custom_call.1} parent=1 // pred_check
      _
    $region15: #{tpu_custom_call.1} parent=1 // pred_check_branch
      %22 = sbr.rel (0) target = $region17
    $region16: #{tpu_custom_call.1} parent=1 // pred_region
      _
    $region17: #{tpu_custom_call.1} parent=1 // pred_fallthru
      _
    // Predicated region
    $region18: #{tpu_custom_call.1} parent=1 // pred_check
      _
    $region19: #{tpu_custom_call.1} parent=1 // pred_check_branch
      %24 = sbr.rel (0) target = $region21
    $region20: #{tpu_custom_call.1} parent=1 // pred_region
      _
    $region21: #{tpu_custom_call.1} parent=1 // pred_fallthru
      _
    // Predicated region
    $region22: #{tpu_custom_call.1} parent=1 // pred_check
      _
    $region23: #{tpu_custom_call.1} parent=1 // pred_check_branch
      %26 = sbr.rel (0) target = $region25
    $region24: #{tpu_custom_call.1} parent=1 // pred_region
      _
    $region25: #{tpu_custom_call.1} parent=1 // pred_fallthru
      _
    // Predicated region
    $region26: #{tpu_custom_call.1} parent=1 // pred_check
      _
    $region27: #{tpu_custom_call.1} parent=1 // pred_check_branch
      %28 = sbr.rel (0) target = $region29
    $region28: #{tpu_custom_call.1} parent=1 // pred_region
      _
    $region29: #{tpu_custom_call.1} parent=1 // pred_fallthru
      _
    // Predicated region
    $region30: #{tpu_custom_call.1} parent=1 // pred_check
      _
    $region31: #{tpu_custom_call.1} parent=1 // pred_check_branch
      %30 = sbr.rel (0) target = $region33
    $region32: #{tpu_custom_call.1} parent=1 // pred_region
      _
    $region33: #{tpu_custom_call.1} parent=1 // pred_fallthru
      _
    // Predicated region
    $region34: #{tpu_custom_call.1} parent=1 // pred_check
      _
    $region35: #{tpu_custom_call.1} parent=1 // pred_check_branch
      %32 = sbr.rel (0) target = $region37
    $region36: #{tpu_custom_call.1} parent=1 // pred_region
      _
    $region37: #{tpu_custom_call.1} parent=1 // pred_fallthru
      _
    %v34 = vld [vmem:[%s1] sm:$0xf]
    %v35 = vld [vmem:[%s1 + $0x4] sm:$0xf]
    %v36 = vld [vmem:[%s1 + $0x8] sm:$0xf]
    %v37 = vld [vmem:[%s1 + $0xc] sm:$0xf]
    %v38 = vld [vmem:[%s0] sm:$0xff]
    %v39 = vld [vmem:[%s0 + $0x8] sm:$0xff]
    %v40 = vld [vmem:[%s0 + $0x10] sm:$0xff]
    %v41 = vld [vmem:[%s0 + $0x18] sm:$0xff]
    %v42 = vld [vmem:[%s0 + $0x20] sm:$0xff]
    %v43 = vld [vmem:[%s0 + $0x28] sm:$0xff]
    %v44 = vld [vmem:[%s0 + $0x30] sm:$0xff]
    %v45 = vld [vmem:[%s0 + $0x38] sm:$0xff]
    %v46 = vld [vmem:[%s2] sm:$0xff]
    %v47 = vld [vmem:[%s2 + $0x8] sm:$0xff]
    %v48 = vld [vmem:[%s2 + $0x10] sm:$0xff]
    %v49 = vld [vmem:[%s2 + $0x18] sm:$0xff]
    %51 = vset.pattern.permute.xlu0 0
    %52 = vperm.xlu0 %51, %v46
    %v53 = vpop.permute.xlu0 %52
    %56 = vset.pattern.permute.xlu0 0
    %57 = vperm.xlu0 %56, %v47
    %v58 = vpop.permute.xlu0 %57
    %61 = vset.pattern.permute.xlu0 0
    %62 = vperm.xlu0 %61, %v48
    %v63 = vpop.permute.xlu0 %62
    %66 = vset.pattern.permute.xlu0 0
    %67 = vperm.xlu0 %66, %v49
    %v68 = vpop.permute.xlu0 %67
    %v74 = vunpack.c.l.b16 %v34
    %v75 = vunpack.c.l.b16 %v35
    %v76 = vunpack.c.l.b16 %v36
    %v77 = vunpack.c.l.b16 %v37
    %v78 = vpack.c.b16 %v75, %v74
    %v79 = vpack.c.b16 %v77, %v76
    %v88 = vunpack.c.l.b16 %v38
    %v89 = vunpack.c.h.b16 %v38
    %v90 = vunpack.c.l.b16 %v39
    %v91 = vunpack.c.h.b16 %v39
    %v92 = vunpack.c.l.b16 %v40
    %v93 = vunpack.c.h.b16 %v40
    %v94 = vunpack.c.l.b16 %v41
    %v95 = vunpack.c.h.b16 %v41
    %v96 = vunpack.c.l.b16 %v42
    %v97 = vunpack.c.h.b16 %v42
    %v98 = vunpack.c.l.b16 %v43
    %v99 = vunpack.c.h.b16 %v43
    %v100 = vunpack.c.l.b16 %v44
    %v101 = vunpack.c.h.b16 %v44
    %v102 = vunpack.c.l.b16 %v45
    %v103 = vunpack.c.h.b16 %v45
    %v104 = vpack.c.b16 %v96, %v88
    %v105 = vpack.c.b16 %v97, %v89
    %v106 = vpack.c.b16 %v98, %v90
    %v107 = vpack.c.b16 %v99, %v91
    %v108 = vpack.c.b16 %v100, %v92
    %v109 = vpack.c.b16 %v101, %v93
    %v110 = vpack.c.b16 %v102, %v94
    %v111 = vpack.c.b16 %v103, %v95
    %vm120 = vcmask 130048
    %v122 = vsel %vm120, %v78, 0
    %v125 = vsel %vm120, %v79, 0
    %127 = vmatprep.subr.bf16.mxu0 %v105
    %128 = vmatpush1.bf16.msra.mxu0 %v104
    %129 = vmatprep.subr.bf16.mxu0 0
    %130 = vmatpush1.bf16.msra.mxu0 0
    %131 = vmatprep.subr.bf16.mxu0 0
    %132 = vmatpush1.bf16.msra.mxu0 0
    %133 = vmatprep.subr.bf16.mxu0 0
    %134 = vmatpush1.bf16.msra.mxu0 0
    %135 = vmatprep.subr.bf16.mxu0 0
    %136 = vmatpush1.bf16.msra.mxu0 0
    %137 = vmatprep.subr.bf16.mxu0 0
    %138 = vmatpush1.bf16.msra.mxu0 0
    %139 = vmatprep.subr.bf16.mxu0 0
    %140 = vmatpush1.bf16.msra.mxu0 0
    %141 = vmatprep.subr.bf16.mxu0 0
    %142 = vmatpush1.bf16.msra.mxu0 0
    %143 = vmatprep.subr.bf16.mxu0 0
    %144 = vmatpush1.bf16.msra.mxu0 0
    %145 = vmatprep.subr.bf16.mxu0 0
    %146 = vmatpush1.bf16.msra.mxu0 0
    %147 = vmatprep.subr.bf16.mxu0 0
    %148 = vmatpush1.bf16.msra.mxu0 0
    %149 = vmatprep.subr.bf16.mxu0 0
    %150 = vmatpush1.bf16.msra.mxu0 0
    %151 = vmatprep.subr.bf16.mxu0 0
    %152 = vmatpush1.bf16.msra.mxu0 0
    %153 = vmatprep.subr.bf16.mxu0 0
    %154 = vmatpush1.bf16.msra.mxu0 0
    %155 = vmatprep.subr.bf16.mxu0 0
    %156 = vmatpush1.bf16.msra.mxu0 0
    %157 = vmatprep.subr.bf16.mxu0 0
    %158 = vmatpush1.bf16.msra.mxu0 0
    %159 = vmatprep.mubr.bf16.mxu0 0
    %160 = vmatmul.mubr.bf16.gmra.mrb[0].mxu0 %v122
    %v161 = vpop.f32.mrb[0].mxu0
    %v162 = vadd.f32 %v53, %v161
    %v163 = vpop.f32.mrb[0].mxu0
    %v164 = vadd.f32 %v53, %v163
    %v165 = vpop.f32.mrb[0].mxu0
    %v166 = vadd.f32 %v58, %v165
    %v167 = vpop.f32.mrb[0].mxu0
    %v168 = vadd.f32 %v58, %v167
    %169 = vmatprep.mubr.bf16.mxu0 0
    %170 = vmatmul.mubr.bf16.gmra.mrb[0].mxu0 %v125
    %v171 = vpop.f32.mrb[0].mxu0
    %v172 = vadd.f32 %v63, %v171
    %v173 = vpop.f32.mrb[0].mxu0
    %v174 = vadd.f32 %v63, %v173
    %v175 = vpop.f32.mrb[0].mxu0
    %v176 = vadd.f32 %v68, %v175
    %v177 = vpop.f32.mrb[0].mxu0
    %v178 = vadd.f32 %v68, %v177
    %179 = vdwg.mxu0
    %180 = vmatprep.subr.bf16.mxu0 %v107
    %181 = vmatpush1.bf16.msra.mxu0 %v106
    %182 = vmatprep.subr.bf16.mxu0 0
    %183 = vmatpush1.bf16.msra.mxu0 0
    %184 = vmatprep.subr.bf16.mxu0 0
    %185 = vmatpush1.bf16.msra.mxu0 0
    %186 = vmatprep.subr.bf16.mxu0 0
    %187 = vmatpush1.bf16.msra.mxu0 0
    %188 = vmatprep.subr.bf16.mxu0 0
    %189 = vmatpush1.bf16.msra.mxu0 0
    %190 = vmatprep.subr.bf16.mxu0 0
    %191 = vmatpush1.bf16.msra.mxu0 0
    %192 = vmatprep.subr.bf16.mxu0 0
    %193 = vmatpush1.bf16.msra.mxu0 0
    %194 = vmatprep.subr.bf16.mxu0 0
    %195 = vmatpush1.bf16.msra.mxu0 0
    %196 = vmatprep.subr.bf16.mxu0 0
    %197 = vmatpush1.bf16.msra.mxu0 0
    %198 = vmatprep.subr.bf16.mxu0 0
    %199 = vmatpush1.bf16.msra.mxu0 0
    %200 = vmatprep.subr.bf16.mxu0 0
    %201 = vmatpush1.bf16.msra.mxu0 0
    %202 = vmatprep.subr.bf16.mxu0 0
    %203 = vmatpush1.bf16.msra.mxu0 0
    %204 = vmatprep.subr.bf16.mxu0 0
    %205 = vmatpush1.bf16.msra.mxu0 0
    %206 = vmatprep.subr.bf16.mxu0 0
    %207 = vmatpush1.bf16.msra.mxu0 0
    %208 = vmatprep.subr.bf16.mxu0 0
    %209 = vmatpush1.bf16.msra.mxu0 0
    %210 = vmatprep.subr.bf16.mxu0 0
    %211 = vmatpush1.bf16.msra.mxu0 0
    %212 = vmatprep.mubr.bf16.mxu0 0
    %213 = vmatmul.mubr.bf16.gmra.mrb[0].mxu0 %v122
    %v214 = vpop.f32.mrb[0].mxu0
    %v215 = vadd.f32 %v53, %v214
    %v216 = vpop.f32.mrb[0].mxu0
    %v217 = vadd.f32 %v53, %v216
    %v218 = vpop.f32.mrb[0].mxu0
    %v219 = vadd.f32 %v58, %v218
    %v220 = vpop.f32.mrb[0].mxu0
    %v221 = vadd.f32 %v58, %v220
    %222 = vmatprep.mubr.bf16.mxu0 0
    %223 = vmatmul.mubr.bf16.gmra.mrb[0].mxu0 %v125
    %v224 = vpop.f32.mrb[0].mxu0
    %v225 = vadd.f32 %v63, %v224
    %v226 = vpop.f32.mrb[0].mxu0
    %v227 = vadd.f32 %v63, %v226
    %v228 = vpop.f32.mrb[0].mxu0
    %v229 = vadd.f32 %v68, %v228
    %v230 = vpop.f32.mrb[0].mxu0
    %v231 = vadd.f32 %v68, %v230
    %232 = vdwg.mxu0
    %233 = vmatprep.subr.bf16.mxu0 %v109
    %234 = vmatpush1.bf16.msra.mxu0 %v108
    %235 = vmatprep.subr.bf16.mxu0 0
    %236 = vmatpush1.bf16.msra.mxu0 0
    %237 = vmatprep.subr.bf16.mxu0 0
    %238 = vmatpush1.bf16.msra.mxu0 0
    %239 = vmatprep.subr.bf16.mxu0 0
    %240 = vmatpush1.bf16.msra.mxu0 0
    %241 = vmatprep.subr.bf16.mxu0 0
    %242 = vmatpush1.bf16.msra.mxu0 0
    %243 = vmatprep.subr.bf16.mxu0 0
    %244 = vmatpush1.bf16.msra.mxu0 0
    %245 = vmatprep.subr.bf16.mxu0 0
    %246 = vmatpush1.bf16.msra.mxu0 0
    %247 = vmatprep.subr.bf16.mxu0 0
    %248 = vmatpush1.bf16.msra.mxu0 0
    %249 = vmatprep.subr.bf16.mxu0 0
    %250 = vmatpush1.bf16.msra.mxu0 0
    %251 = vmatprep.subr.bf16.mxu0 0
    %252 = vmatpush1.bf16.msra.mxu0 0
    %253 = vmatprep.subr.bf16.mxu0 0
    %254 = vmatpush1.bf16.msra.mxu0 0
    %255 = vmatprep.subr.bf16.mxu0 0
    %256 = vmatpush1.bf16.msra.mxu0 0
    %257 = vmatprep.subr.bf16.mxu0 0
    %258 = vmatpush1.bf16.msra.mxu0 0
    %259 = vmatprep.subr.bf16.mxu0 0
    %260 = vmatpush1.bf16.msra.mxu0 0
    %261 = vmatprep.subr.bf16.mxu0 0
    %262 = vmatpush1.bf16.msra.mxu0 0
    %263 = vmatprep.subr.bf16.mxu0 0
    %264 = vmatpush1.bf16.msra.mxu0 0
    %265 = vmatprep.mubr.bf16.mxu0 0
    %266 = vmatmul.mubr.bf16.gmra.mrb[0].mxu0 %v122
    %v267 = vpop.f32.mrb[0].mxu0
    %v268 = vadd.f32 %v53, %v267
    %v269 = vpop.f32.mrb[0].mxu0
    %v270 = vadd.f32 %v53, %v269
    %v271 = vpop.f32.mrb[0].mxu0
    %v272 = vadd.f32 %v58, %v271
    %v273 = vpop.f32.mrb[0].mxu0
    %v274 = vadd.f32 %v58, %v273
    %275 = vmatprep.mubr.bf16.mxu0 0
    %276 = vmatmul.mubr.bf16.gmra.mrb[0].mxu0 %v125
    %v277 = vpop.f32.mrb[0].mxu0
    %v278 = vadd.f32 %v63, %v277
    %v279 = vpop.f32.mrb[0].mxu0
    %v280 = vadd.f32 %v63, %v279
    %v281 = vpop.f32.mrb[0].mxu0
    %v282 = vadd.f32 %v68, %v281
    %v283 = vpop.f32.mrb[0].mxu0
    %v284 = vadd.f32 %v68, %v283
    %285 = vdwg.mxu0
    %286 = vmatprep.subr.bf16.mxu0 %v111
    %287 = vmatpush1.bf16.msra.mxu0 %v110
    %288 = vmatprep.subr.bf16.mxu0 0
    %289 = vmatpush1.bf16.msra.mxu0 0
    %290 = vmatprep.subr.bf16.mxu0 0
    %291 = vmatpush1.bf16.msra.mxu0 0
    %292 = vmatprep.subr.bf16.mxu0 0
    %293 = vmatpush1.bf16.msra.mxu0 0
    %294 = vmatprep.subr.bf16.mxu0 0
    %295 = vmatpush1.bf16.msra.mxu0 0
    %296 = vmatprep.subr.bf16.mxu0 0
    %297 = vmatpush1.bf16.msra.mxu0 0
    %298 = vmatprep.subr.bf16.mxu0 0
    %299 = vmatpush1.bf16.msra.mxu0 0
    %300 = vmatprep.subr.bf16.mxu0 0
    %301 = vmatpush1.bf16.msra.mxu0 0
    %302 = vmatprep.subr.bf16.mxu0 0
    %303 = vmatpush1.bf16.msra.mxu0 0
    %304 = vmatprep.subr.bf16.mxu0 0
    %305 = vmatpush1.bf16.msra.mxu0 0
    %306 = vmatprep.subr.bf16.mxu0 0
    %307 = vmatpush1.bf16.msra.mxu0 0
    %308 = vmatprep.subr.bf16.mxu0 0
    %309 = vmatpush1.bf16.msra.mxu0 0
    %310 = vmatprep.subr.bf16.mxu0 0
    %311 = vmatpush1.bf16.msra.mxu0 0
    %312 = vmatprep.subr.bf16.mxu0 0
    %313 = vmatpush1.bf16.msra.mxu0 0
    %314 = vmatprep.subr.bf16.mxu0 0
    %315 = vmatpush1.bf16.msra.mxu0 0
    %316 = vmatprep.subr.bf16.mxu0 0
    %317 = vmatpush1.bf16.msra.mxu0 0
    %318 = vmatprep.mubr.bf16.mxu0 0
    %319 = vmatmul.mubr.bf16.gmra.mrb[0].mxu0 %v122
    %v320 = vpop.f32.mrb[0].mxu0
    %v321 = vadd.f32 %v53, %v320
    %v322 = vpop.f32.mrb[0].mxu0
    %v323 = vadd.f32 %v53, %v322
    %v324 = vpop.f32.mrb[0].mxu0
    %v325 = vadd.f32 %v58, %v324
    %v326 = vpop.f32.mrb[0].mxu0
    %v327 = vadd.f32 %v58, %v326
    %328 = vmatprep.mubr.bf16.mxu0 0
    %329 = vmatmul.mubr.bf16.gmra.mrb[0].mxu0 %v125
    %v330 = vpop.f32.mrb[0].mxu0
    %v331 = vadd.f32 %v63, %v330
    %v332 = vpop.f32.mrb[0].mxu0
    %v333 = vadd.f32 %v63, %v332
    %v334 = vpop.f32.mrb[0].mxu0
    %v335 = vadd.f32 %v68, %v334
    %v336 = vpop.f32.mrb[0].mxu0
    %v337 = vadd.f32 %v68, %v336
    %338 = vdwg.mxu0
    %v339 = vmin.f32 %v162, 20.0
    %v340 = vmin.f32 %v164, 20.0
    %v341 = vmin.f32 %v215, 20.0
    %v342 = vmin.f32 %v217, 20.0
    %v343 = vmin.f32 %v268, 20.0
    %v344 = vmin.f32 %v270, 20.0
    %v345 = vmin.f32 %v321, 20.0
    %v346 = vmin.f32 %v323, 20.0
    %v347 = vmin.f32 %v166, 20.0
    %v348 = vmin.f32 %v168, 20.0
    %v349 = vmin.f32 %v219, 20.0
    %v350 = vmin.f32 %v221, 20.0
    %v351 = vmin.f32 %v272, 20.0
    %v352 = vmin.f32 %v274, 20.0
    %v353 = vmin.f32 %v325, 20.0
    %v354 = vmin.f32 %v327, 20.0
    %v355 = vmin.f32 %v172, 20.0
    %v356 = vmin.f32 %v174, 20.0
    %v357 = vmin.f32 %v225, 20.0
    %v358 = vmin.f32 %v227, 20.0
    %v359 = vmin.f32 %v278, 20.0
    %v360 = vmin.f32 %v280, 20.0
    %v361 = vmin.f32 %v331, 20.0
    %v362 = vmin.f32 %v333, 20.0
    %v363 = vmin.f32 %v176, 20.0
    %v364 = vmin.f32 %v178, 20.0
    %v365 = vmin.f32 %v229, 20.0
    %v366 = vmin.f32 %v231, 20.0
    %v367 = vmin.f32 %v282, 20.0
    %v368 = vmin.f32 %v284, 20.0
    %v369 = vmin.f32 %v335, 20.0
    %v370 = vmin.f32 %v337, 20.0
    %v371 = vmul.f32 %v339, 1.442695
    %v372 = vpow.pop %v371
    %v373 = vmul.f32 %v340, 1.442695
    %v374 = vpow.pop %v373
    %v375 = vmul.f32 %v341, 1.442695
    %v376 = vpow.pop %v375
    %v377 = vmul.f32 %v342, 1.442695
    %v378 = vpow.pop %v377
    %v379 = vmul.f32 %v343, 1.442695
    %v380 = vpow.pop %v379
    %v381 = vmul.f32 %v344, 1.442695
    %v382 = vpow.pop %v381
    %v383 = vmul.f32 %v345, 1.442695
    %v384 = vpow.pop %v383
    %v385 = vmul.f32 %v346, 1.442695
    %v386 = vpow.pop %v385
    %v387 = vmul.f32 %v347, 1.442695
    %v388 = vpow.pop %v387
    %v389 = vmul.f32 %v348, 1.442695
    %v390 = vpow.pop %v389
    %v391 = vmul.f32 %v349, 1.442695
    %v392 = vpow.pop %v391
    %v393 = vmul.f32 %v350, 1.442695
    %v394 = vpow.pop %v393
    %v395 = vmul.f32 %v351, 1.442695
    %v396 = vpow.pop %v395
    %v397 = vmul.f32 %v352, 1.442695
    %v398 = vpow.pop %v397
    %v399 = vmul.f32 %v353, 1.442695
    %v400 = vpow.pop %v399
    %v401 = vmul.f32 %v354, 1.442695
    %v402 = vpow.pop %v401
    %v403 = vmul.f32 %v355, 1.442695
    %v404 = vpow.pop %v403
    %v405 = vmul.f32 %v356, 1.442695
    %v406 = vpow.pop %v405
    %v407 = vmul.f32 %v357, 1.442695
    %v408 = vpow.pop %v407
    %v409 = vmul.f32 %v358, 1.442695
    %v410 = vpow.pop %v409
    %v411 = vmul.f32 %v359, 1.442695
    %v412 = vpow.pop %v411
    %v413 = vmul.f32 %v360, 1.442695
    %v414 = vpow.pop %v413
    %v415 = vmul.f32 %v361, 1.442695
    %v416 = vpow.pop %v415
    %v417 = vmul.f32 %v362, 1.442695
    %v418 = vpow.pop %v417
    %v419 = vmul.f32 %v363, 1.442695
    %v420 = vpow.pop %v419
    %v421 = vmul.f32 %v364, 1.442695
    %v422 = vpow.pop %v421
    %v423 = vmul.f32 %v365, 1.442695
    %v424 = vpow.pop %v423
    %v425 = vmul.f32 %v366, 1.442695
    %v426 = vpow.pop %v425
    %v427 = vmul.f32 %v367, 1.442695
    %v428 = vpow.pop %v427
    %v429 = vmul.f32 %v368, 1.442695
    %v430 = vpow.pop %v429
    %v431 = vmul.f32 %v369, 1.442695
    %v432 = vpow.pop %v431
    %v433 = vmul.f32 %v370, 1.442695
    %v434 = vpow.pop %v433
    %v435 = vadd.f32 %v372, 2.0
    %v436 = vadd.f32 %v374, 2.0
    %v437 = vadd.f32 %v376, 2.0
    %v438 = vadd.f32 %v378, 2.0
    %v439 = vadd.f32 %v380, 2.0
    %v440 = vadd.f32 %v382, 2.0
    %v441 = vadd.f32 %v384, 2.0
    %v442 = vadd.f32 %v386, 2.0
    %v443 = vadd.f32 %v388, 2.0
    %v444 = vadd.f32 %v390, 2.0
    %v445 = vadd.f32 %v392, 2.0
    %v446 = vadd.f32 %v394, 2.0
    %v447 = vadd.f32 %v396, 2.0
    %v448 = vadd.f32 %v398, 2.0
    %v449 = vadd.f32 %v400, 2.0
    %v450 = vadd.f32 %v402, 2.0
    %v451 = vadd.f32 %v404, 2.0
    %v452 = vadd.f32 %v406, 2.0
    %v453 = vadd.f32 %v408, 2.0
    %v454 = vadd.f32 %v410, 2.0
    %v455 = vadd.f32 %v412, 2.0
    %v456 = vadd.f32 %v414, 2.0
    %v457 = vadd.f32 %v416, 2.0
    %v458 = vadd.f32 %v418, 2.0
    %v459 = vadd.f32 %v420, 2.0
    %v460 = vadd.f32 %v422, 2.0
    %v461 = vadd.f32 %v424, 2.0
    %v462 = vadd.f32 %v426, 2.0
    %v463 = vadd.f32 %v428, 2.0
    %v464 = vadd.f32 %v430, 2.0
    %v465 = vadd.f32 %v432, 2.0
    %v466 = vadd.f32 %v434, 2.0
    %v467 = vmul.f32 %v372, %v435
    %v468 = vmul.f32 %v374, %v436
    %v469 = vmul.f32 %v376, %v437
    %v470 = vmul.f32 %v378, %v438
    %v471 = vmul.f32 %v380, %v439
    %v472 = vmul.f32 %v382, %v440
    %v473 = vmul.f32 %v384, %v441
    %v474 = vmul.f32 %v386, %v442
    %v475 = vmul.f32 %v388, %v443
    %v476 = vmul.f32 %v390, %v444
    %v477 = vmul.f32 %v392, %v445
    %v478 = vmul.f32 %v394, %v446
    %v479 = vmul.f32 %v396, %v447
    %v480 = vmul.f32 %v398, %v448
    %v481 = vmul.f32 %v400, %v449
    %v482 = vmul.f32 %v402, %v450
    %v483 = vmul.f32 %v404, %v451
    %v484 = vmul.f32 %v406, %v452
    %v485 = vmul.f32 %v408, %v453
    %v486 = vmul.f32 %v410, %v454
    %v487 = vmul.f32 %v412, %v455
    %v488 = vmul.f32 %v414, %v456
    %v489 = vmul.f32 %v416, %v457
    %v490 = vmul.f32 %v418, %v458
    %v491 = vmul.f32 %v420, %v459
    %v492 = vmul.f32 %v422, %v460
    %v493 = vmul.f32 %v424, %v461
    %v494 = vmul.f32 %v426, %v462
    %v495 = vmul.f32 %v428, %v463
    %v496 = vmul.f32 %v430, %v464
    %v497 = vmul.f32 %v432, %v465
    %v498 = vmul.f32 %v434, %v466
    %v499 = vmul.f32 %v162, %v467
    %v500 = vmul.f32 %v164, %v468
    %v501 = vmul.f32 %v215, %v469
    %v502 = vmul.f32 %v217, %v470
    %v503 = vmul.f32 %v268, %v471
    %v504 = vmul.f32 %v270, %v472
    %v505 = vmul.f32 %v321, %v473
    %v506 = vmul.f32 %v323, %v474
    %v507 = vmul.f32 %v166, %v475
    %v508 = vmul.f32 %v168, %v476
    %v509 = vmul.f32 %v219, %v477
    %v510 = vmul.f32 %v221, %v478
    %v511 = vmul.f32 %v272, %v479
    %v512 = vmul.f32 %v274, %v480
    %v513 = vmul.f32 %v325, %v481
    %v514 = vmul.f32 %v327, %v482
    %v515 = vmul.f32 %v172, %v483
    %v516 = vmul.f32 %v174, %v484
    %v517 = vmul.f32 %v225, %v485
    %v518 = vmul.f32 %v227, %v486
    %v519 = vmul.f32 %v278, %v487
    %v520 = vmul.f32 %v280, %v488
    %v521 = vmul.f32 %v331, %v489
    %v522 = vmul.f32 %v333, %v490
    %v523 = vmul.f32 %v176, %v491
    %v524 = vmul.f32 %v178, %v492
    %v525 = vmul.f32 %v229, %v493
    %v526 = vmul.f32 %v231, %v494
    %v527 = vmul.f32 %v282, %v495
    %v528 = vmul.f32 %v284, %v496
    %v529 = vmul.f32 %v335, %v497
    %v530 = vmul.f32 %v337, %v498
    %v531 = vadd.f32 %v467, 2.0
    %v532 = vadd.f32 %v468, 2.0
    %v533 = vadd.f32 %v469, 2.0
    %v534 = vadd.f32 %v470, 2.0
    %v535 = vadd.f32 %v471, 2.0
    %v536 = vadd.f32 %v472, 2.0
    %v537 = vadd.f32 %v473, 2.0
    %v538 = vadd.f32 %v474, 2.0
    %v539 = vadd.f32 %v475, 2.0
    %v540 = vadd.f32 %v476, 2.0
    %v541 = vadd.f32 %v477, 2.0
    %v542 = vadd.f32 %v478, 2.0
    %v543 = vadd.f32 %v479, 2.0
    %v544 = vadd.f32 %v480, 2.0
    %v545 = vadd.f32 %v481, 2.0
    %v546 = vadd.f32 %v482, 2.0
    %v547 = vadd.f32 %v483, 2.0
    %v548 = vadd.f32 %v484, 2.0
    %v549 = vadd.f32 %v485, 2.0
    %v550 = vadd.f32 %v486, 2.0
    %v551 = vadd.f32 %v487, 2.0
    %v552 = vadd.f32 %v488, 2.0
    %v553 = vadd.f32 %v489, 2.0
    %v554 = vadd.f32 %v490, 2.0
    %v555 = vadd.f32 %v491, 2.0
    %v556 = vadd.f32 %v492, 2.0
    %v557 = vadd.f32 %v493, 2.0
    %v558 = vadd.f32 %v494, 2.0
    %v559 = vadd.f32 %v495, 2.0
    %v560 = vadd.f32 %v496, 2.0
    %v561 = vadd.f32 %v497, 2.0
    %v562 = vadd.f32 %v498, 2.0
    %v563 = vrcp.pop %v531
    %v564 = vrcp.pop %v532
    %v565 = vrcp.pop %v533
    %v566 = vrcp.pop %v534
    %v567 = vrcp.pop %v535
    %v568 = vrcp.pop %v536
    %v569 = vrcp.pop %v537
    %v570 = vrcp.pop %v538
    %v571 = vrcp.pop %v539
    %v572 = vrcp.pop %v540
    %v573 = vrcp.pop %v541
    %v574 = vrcp.pop %v542
    %v575 = vrcp.pop %v543
    %v576 = vrcp.pop %v544
    %v577 = vrcp.pop %v545
    %v578 = vrcp.pop %v546
    %v579 = vrcp.pop %v547
    %v580 = vrcp.pop %v548
    %v581 = vrcp.pop %v549
    %v582 = vrcp.pop %v550
    %v583 = vrcp.pop %v551
    %v584 = vrcp.pop %v552
    %v585 = vrcp.pop %v553
    %v586 = vrcp.pop %v554
    %v587 = vrcp.pop %v555
    %v588 = vrcp.pop %v556
    %v589 = vrcp.pop %v557
    %v590 = vrcp.pop %v558
    %v591 = vrcp.pop %v559
    %v592 = vrcp.pop %v560
    %v593 = vrcp.pop %v561
    %v594 = vrcp.pop %v562
    %v595 = vmul.f32 %v499, %v563
    %v596 = vmul.f32 %v500, %v564
    %v597 = vmul.f32 %v501, %v565
    %v598 = vmul.f32 %v502, %v566
    %v599 = vmul.f32 %v503, %v567
    %v600 = vmul.f32 %v504, %v568
    %v601 = vmul.f32 %v505, %v569
    %v602 = vmul.f32 %v506, %v570
    %v603 = vmul.f32 %v507, %v571
    %v604 = vmul.f32 %v508, %v572
    %v605 = vmul.f32 %v509, %v573
    %v606 = vmul.f32 %v510, %v574
    %v607 = vmul.f32 %v511, %v575
    %v608 = vmul.f32 %v512, %v576
    %v609 = vmul.f32 %v513, %v577
    %v610 = vmul.f32 %v514, %v578
    %v611 = vmul.f32 %v515, %v579
    %v612 = vmul.f32 %v516, %v580
    %v613 = vmul.f32 %v517, %v581
    %v614 = vmul.f32 %v518, %v582
    %v615 = vmul.f32 %v519, %v583
    %v616 = vmul.f32 %v520, %v584
    %v617 = vmul.f32 %v521, %v585
    %v618 = vmul.f32 %v522, %v586
    %v619 = vmul.f32 %v523, %v587
    %v620 = vmul.f32 %v524, %v588
    %v621 = vmul.f32 %v525, %v589
    %v622 = vmul.f32 %v526, %v590
    %v623 = vmul.f32 %v527, %v591
    %v624 = vmul.f32 %v528, %v592
    %v625 = vmul.f32 %v529, %v593
    %v626 = vmul.f32 %v530, %v594
    %v627 = vld [vmem:[%s3] sm:$0xf]
    %v628 = vld [vmem:[%s3 + $0x4] sm:$0xf]
    %v629 = vld [vmem:[%s3 + $0x8] sm:$0xf]
    %v630 = vld [vmem:[%s3 + $0xc] sm:$0xf]
    %v631 = vpack.c.bf16 %v603, %v595
    %v632 = vpack.c.bf16 %v604, %v596
    %v633 = vpack.c.bf16 %v605, %v597
    %v634 = vpack.c.bf16 %v606, %v598
    %v635 = vpack.c.bf16 %v607, %v599
    %v636 = vpack.c.bf16 %v608, %v600
    %v637 = vpack.c.bf16 %v609, %v601
    %v638 = vpack.c.bf16 %v610, %v602
    %v639 = vpack.c.bf16 %v619, %v611
    %v640 = vpack.c.bf16 %v620, %v612
    %v641 = vpack.c.bf16 %v621, %v613
    %v642 = vpack.c.bf16 %v622, %v614
    %v643 = vpack.c.bf16 %v623, %v615
    %v644 = vpack.c.bf16 %v624, %v616
    %v645 = vpack.c.bf16 %v625, %v617
    %v646 = vpack.c.bf16 %v626, %v618
    %v647 = vld [vmem:[%s4] sm:$0xff]
    %v648 = vld [vmem:[%s4 + $0x8] sm:$0xff]
    %v649 = vld [vmem:[%s4 + $0x10] sm:$0xff]
    %v650 = vld [vmem:[%s4 + $0x18] sm:$0xff]
    %652 = vset.pattern.permute.xlu0 0
    %653 = vperm.xlu0 %652, %v647
    %v654 = vpop.permute.xlu0 %653
    %657 = vset.pattern.permute.xlu0 0
    %658 = vperm.xlu0 %657, %v648
    %v659 = vpop.permute.xlu0 %658
    %662 = vset.pattern.permute.xlu0 0
    %663 = vperm.xlu0 %662, %v649
    %v664 = vpop.permute.xlu0 %663
    %667 = vset.pattern.permute.xlu0 0
    %668 = vperm.xlu0 %667, %v650
    %v669 = vpop.permute.xlu0 %668
    %v675 = vunpack.c.l.b16 %v627
    %v676 = vunpack.c.l.b16 %v628
    %v677 = vunpack.c.l.b16 %v629
    %v678 = vunpack.c.l.b16 %v630
    %v679 = vpack.c.b16 %v676, %v675
    %v680 = vpack.c.b16 %v678, %v677
    %vm681 = vcmask 261120
    %v683 = vsel %vm681, %v679, 0
    %v686 = vsel %vm681, %v680, 0
    %688 = vmatprep.subr.bf16.mxu0 %v632
    %689 = vmatpush1.bf16.msra.mxu0 %v631
    %690 = vmatprep.subr.bf16.mxu0 %v640
    %691 = vmatpush1.bf16.msra.mxu0 %v639
    %692 = vmatprep.subr.bf16.mxu0 0
    %693 = vmatpush1.bf16.msra.mxu0 0
    %694 = vmatprep.subr.bf16.mxu0 0
    %695 = vmatpush1.bf16.msra.mxu0 0
    %696 = vmatprep.subr.bf16.mxu0 0
    %697 = vmatpush1.bf16.msra.mxu0 0
    %698 = vmatprep.subr.bf16.mxu0 0
    %699 = vmatpush1.bf16.msra.mxu0 0
    %700 = vmatprep.subr.bf16.mxu0 0
    %701 = vmatpush1.bf16.msra.mxu0 0
    %702 = vmatprep.subr.bf16.mxu0 0
    %703 = vmatpush1.bf16.msra.mxu0 0
    %704 = vmatprep.subr.bf16.mxu0 0
    %705 = vmatpush1.bf16.msra.mxu0 0
    %706 = vmatprep.subr.bf16.mxu0 0
    %707 = vmatpush1.bf16.msra.mxu0 0
    %708 = vmatprep.subr.bf16.mxu0 0
    %709 = vmatpush1.bf16.msra.mxu0 0
    %710 = vmatprep.subr.bf16.mxu0 0
    %711 = vmatpush1.bf16.msra.mxu0 0
    %712 = vmatprep.subr.bf16.mxu0 0
    %713 = vmatpush1.bf16.msra.mxu0 0
    %714 = vmatprep.subr.bf16.mxu0 0
    %715 = vmatpush1.bf16.msra.mxu0 0
    %716 = vmatprep.subr.bf16.mxu0 0
    %717 = vmatpush1.bf16.msra.mxu0 0
    %718 = vmatprep.subr.bf16.mxu0 0
    %719 = vmatpush1.bf16.msra.mxu0 0
    %720 = vmatprep.mubr.bf16.mxu0 0
    %721 = vmatmul.mubr.bf16.gmra.mrb[0].mxu0 %v683
    %v722 = vpop.f32.mrb[0].mxu0
    %v723 = vadd.f32 %v654, %v722
    %v724 = vpop.f32.mrb[0].mxu0
    %v725 = vadd.f32 %v654, %v724
    %v726 = vpop.f32.mrb[0].mxu0
    %v727 = vadd.f32 %v659, %v726
    %v728 = vpop.f32.mrb[0].mxu0
    %v729 = vadd.f32 %v659, %v728
    %730 = vmatprep.mubr.bf16.mxu0 0
    %731 = vmatmul.mubr.bf16.gmra.mrb[0].mxu0 %v686
    %v732 = vpop.f32.mrb[0].mxu0
    %v733 = vadd.f32 %v664, %v732
    %v734 = vpop.f32.mrb[0].mxu0
    %v735 = vadd.f32 %v664, %v734
    %v736 = vpop.f32.mrb[0].mxu0
    %v737 = vadd.f32 %v669, %v736
    %v738 = vpop.f32.mrb[0].mxu0
    %v739 = vadd.f32 %v669, %v738
    %740 = vdwg.mxu0
    %741 = vmatprep.subr.bf16.mxu0 %v634
    %742 = vmatpush1.bf16.msra.mxu0 %v633
    %743 = vmatprep.subr.bf16.mxu0 %v642
    %744 = vmatpush1.bf16.msra.mxu0 %v641
    %745 = vmatprep.subr.bf16.mxu0 0
    %746 = vmatpush1.bf16.msra.mxu0 0
    %747 = vmatprep.subr.bf16.mxu0 0
    %748 = vmatpush1.bf16.msra.mxu0 0
    %749 = vmatprep.subr.bf16.mxu0 0
    %750 = vmatpush1.bf16.msra.mxu0 0
    %751 = vmatprep.subr.bf16.mxu0 0
    %752 = vmatpush1.bf16.msra.mxu0 0
    %753 = vmatprep.subr.bf16.mxu0 0
    %754 = vmatpush1.bf16.msra.mxu0 0
    %755 = vmatprep.subr.bf16.mxu0 0
    %756 = vmatpush1.bf16.msra.mxu0 0
    %757 = vmatprep.subr.bf16.mxu0 0
    %758 = vmatpush1.bf16.msra.mxu0 0
    %759 = vmatprep.subr.bf16.mxu0 0
    %760 = vmatpush1.bf16.msra.mxu0 0
    %761 = vmatprep.subr.bf16.mxu0 0
    %762 = vmatpush1.bf16.msra.mxu0 0
    %763 = vmatprep.subr.bf16.mxu0 0
    %764 = vmatpush1.bf16.msra.mxu0 0
    %765 = vmatprep.subr.bf16.mxu0 0
    %766 = vmatpush1.bf16.msra.mxu0 0
    %767 = vmatprep.subr.bf16.mxu0 0
    %768 = vmatpush1.bf16.msra.mxu0 0
    %769 = vmatprep.subr.bf16.mxu0 0
    %770 = vmatpush1.bf16.msra.mxu0 0
    %771 = vmatprep.subr.bf16.mxu0 0
    %772 = vmatpush1.bf16.msra.mxu0 0
    %773 = vmatprep.mubr.bf16.mxu0 0
    %774 = vmatmul.mubr.bf16.gmra.mrb[0].mxu0 %v683
    %v775 = vpop.f32.mrb[0].mxu0
    %v776 = vadd.f32 %v654, %v775
    %v777 = vpop.f32.mrb[0].mxu0
    %v778 = vadd.f32 %v654, %v777
    %v779 = vpop.f32.mrb[0].mxu0
    %v780 = vadd.f32 %v659, %v779
    %v781 = vpop.f32.mrb[0].mxu0
    %v782 = vadd.f32 %v659, %v781
    %783 = vmatprep.mubr.bf16.mxu0 0
    %784 = vmatmul.mubr.bf16.gmra.mrb[0].mxu0 %v686
    %v785 = vpop.f32.mrb[0].mxu0
    %v786 = vadd.f32 %v664, %v785
    %v787 = vpop.f32.mrb[0].mxu0
    %v788 = vadd.f32 %v664, %v787
    %v789 = vpop.f32.mrb[0].mxu0
    %v790 = vadd.f32 %v669, %v789
    %v791 = vpop.f32.mrb[0].mxu0
    %v792 = vadd.f32 %v669, %v791
    %793 = vdwg.mxu0
    %794 = vmatprep.subr.bf16.mxu0 %v636
    %795 = vmatpush1.bf16.msra.mxu0 %v635
    %796 = vmatprep.subr.bf16.mxu0 %v644
    %797 = vmatpush1.bf16.msra.mxu0 %v643
    %798 = vmatprep.subr.bf16.mxu0 0
    %799 = vmatpush1.bf16.msra.mxu0 0
    %800 = vmatprep.subr.bf16.mxu0 0
    %801 = vmatpush1.bf16.msra.mxu0 0
    %802 = vmatprep.subr.bf16.mxu0 0
    %803 = vmatpush1.bf16.msra.mxu0 0
    %804 = vmatprep.subr.bf16.mxu0 0
    %805 = vmatpush1.bf16.msra.mxu0 0
    %806 = vmatprep.subr.bf16.mxu0 0
    %807 = vmatpush1.bf16.msra.mxu0 0
    %808 = vmatprep.subr.bf16.mxu0 0
    %809 = vmatpush1.bf16.msra.mxu0 0
    %810 = vmatprep.subr.bf16.mxu0 0
    %811 = vmatpush1.bf16.msra.mxu0 0
    %812 = vmatprep.subr.bf16.mxu0 0
    %813 = vmatpush1.bf16.msra.mxu0 0
    %814 = vmatprep.subr.bf16.mxu0 0
    %815 = vmatpush1.bf16.msra.mxu0 0
    %816 = vmatprep.subr.bf16.mxu0 0
    %817 = vmatpush1.bf16.msra.mxu0 0
    %818 = vmatprep.subr.bf16.mxu0 0
    %819 = vmatpush1.bf16.msra.mxu0 0
    %820 = vmatprep.subr.bf16.mxu0 0
    %821 = vmatpush1.bf16.msra.mxu0 0
    %822 = vmatprep.subr.bf16.mxu0 0
    %823 = vmatpush1.bf16.msra.mxu0 0
    %824 = vmatprep.subr.bf16.mxu0 0
    %825 = vmatpush1.bf16.msra.mxu0 0
    %826 = vmatprep.mubr.bf16.mxu0 0
    %827 = vmatmul.mubr.bf16.gmra.mrb[0].mxu0 %v683
    %v828 = vpop.f32.mrb[0].mxu0
    %v829 = vadd.f32 %v654, %v828
    %v830 = vpop.f32.mrb[0].mxu0
    %v831 = vadd.f32 %v654, %v830
    %v832 = vpop.f32.mrb[0].mxu0
    %v833 = vadd.f32 %v659, %v832
    %v834 = vpop.f32.mrb[0].mxu0
    %v835 = vadd.f32 %v659, %v834
    %836 = vmatprep.mubr.bf16.mxu0 0
    %837 = vmatmul.mubr.bf16.gmra.mrb[0].mxu0 %v686
    %v838 = vpop.f32.mrb[0].mxu0
    %v839 = vadd.f32 %v664, %v838
    %v840 = vpop.f32.mrb[0].mxu0
    %v841 = vadd.f32 %v664, %v840
    %v842 = vpop.f32.mrb[0].mxu0
    %v843 = vadd.f32 %v669, %v842
    %v844 = vpop.f32.mrb[0].mxu0
    %v845 = vadd.f32 %v669, %v844
    %846 = vdwg.mxu0
    %847 = vmatprep.subr.bf16.mxu0 %v638
    %848 = vmatpush1.bf16.msra.mxu0 %v637
    %849 = vmatprep.subr.bf16.mxu0 %v646
    %850 = vmatpush1.bf16.msra.mxu0 %v645
    %851 = vmatprep.subr.bf16.mxu0 0
    %852 = vmatpush1.bf16.msra.mxu0 0
    %853 = vmatprep.subr.bf16.mxu0 0
    %854 = vmatpush1.bf16.msra.mxu0 0
    %855 = vmatprep.subr.bf16.mxu0 0
    %856 = vmatpush1.bf16.msra.mxu0 0
    %857 = vmatprep.subr.bf16.mxu0 0
    %858 = vmatpush1.bf16.msra.mxu0 0
    %859 = vmatprep.subr.bf16.mxu0 0
    %860 = vmatpush1.bf16.msra.mxu0 0
    %861 = vmatprep.subr.bf16.mxu0 0
    %862 = vmatpush1.bf16.msra.mxu0 0
    %863 = vmatprep.subr.bf16.mxu0 0
    %864 = vmatpush1.bf16.msra.mxu0 0
    %865 = vmatprep.subr.bf16.mxu0 0
    %866 = vmatpush1.bf16.msra.mxu0 0
    %867 = vmatprep.subr.bf16.mxu0 0
    %868 = vmatpush1.bf16.msra.mxu0 0
    %869 = vmatprep.subr.bf16.mxu0 0
    %870 = vmatpush1.bf16.msra.mxu0 0
    %871 = vmatprep.subr.bf16.mxu0 0
    %872 = vmatpush1.bf16.msra.mxu0 0
    %873 = vmatprep.subr.bf16.mxu0 0
    %874 = vmatpush1.bf16.msra.mxu0 0
    %875 = vmatprep.subr.bf16.mxu0 0
    %876 = vmatpush1.bf16.msra.mxu0 0
    %877 = vmatprep.subr.bf16.mxu0 0
    %878 = vmatpush1.bf16.msra.mxu0 0
    %879 = vmatprep.mubr.bf16.mxu0 0
    %880 = vmatmul.mubr.bf16.gmra.mrb[0].mxu0 %v683
    %v881 = vpop.f32.mrb[0].mxu0
    %v882 = vadd.f32 %v654, %v881
    %v883 = vpop.f32.mrb[0].mxu0
    %v884 = vadd.f32 %v654, %v883
    %v885 = vpop.f32.mrb[0].mxu0
    %v886 = vadd.f32 %v659, %v885
    %v887 = vpop.f32.mrb[0].mxu0
    %v888 = vadd.f32 %v659, %v887
    %889 = vmatprep.mubr.bf16.mxu0 0
    %890 = vmatmul.mubr.bf16.gmra.mrb[0].mxu0 %v686
    %v891 = vpop.f32.mrb[0].mxu0
    %v892 = vadd.f32 %v664, %v891
    %v893 = vpop.f32.mrb[0].mxu0
    %v894 = vadd.f32 %v664, %v893
    %v895 = vpop.f32.mrb[0].mxu0
    %v896 = vadd.f32 %v669, %v895
    %v897 = vpop.f32.mrb[0].mxu0
    %v898 = vadd.f32 %v669, %v897
    %899 = vdwg.mxu0
    %v900 = vmin.f32 %v723, 20.0
    %v901 = vmin.f32 %v725, 20.0
    %v902 = vmin.f32 %v776, 20.0
    %v903 = vmin.f32 %v778, 20.0
    %v904 = vmin.f32 %v829, 20.0
    %v905 = vmin.f32 %v831, 20.0
    %v906 = vmin.f32 %v882, 20.0
    %v907 = vmin.f32 %v884, 20.0
    %v908 = vmin.f32 %v727, 20.0
    %v909 = vmin.f32 %v729, 20.0
    %v910 = vmin.f32 %v780, 20.0
    %v911 = vmin.f32 %v782, 20.0
    %v912 = vmin.f32 %v833, 20.0
    %v913 = vmin.f32 %v835, 20.0
    %v914 = vmin.f32 %v886, 20.0
    %v915 = vmin.f32 %v888, 20.0
    %v916 = vmin.f32 %v733, 20.0
    %v917 = vmin.f32 %v735, 20.0
    %v918 = vmin.f32 %v786, 20.0
    %v919 = vmin.f32 %v788, 20.0
    %v920 = vmin.f32 %v839, 20.0
    %v921 = vmin.f32 %v841, 20.0
    %v922 = vmin.f32 %v892, 20.0
    %v923 = vmin.f32 %v894, 20.0
    %v924 = vmin.f32 %v737, 20.0
    %v925 = vmin.f32 %v739, 20.0
    %v926 = vmin.f32 %v790, 20.0
    %v927 = vmin.f32 %v792, 20.0
    %v928 = vmin.f32 %v843, 20.0
    %v929 = vmin.f32 %v845, 20.0
    %v930 = vmin.f32 %v896, 20.0
    %v931 = vmin.f32 %v898, 20.0
    %v932 = vmul.f32 %v900, 1.442695
    %v933 = vpow.pop %v932
    %v934 = vmul.f32 %v901, 1.442695
    %v935 = vpow.pop %v934
    %v936 = vmul.f32 %v902, 1.442695
    %v937 = vpow.pop %v936
    %v938 = vmul.f32 %v903, 1.442695
    %v939 = vpow.pop %v938
    %v940 = vmul.f32 %v904, 1.442695
    %v941 = vpow.pop %v940
    %v942 = vmul.f32 %v905, 1.442695
    %v943 = vpow.pop %v942
    %v944 = vmul.f32 %v906, 1.442695
    %v945 = vpow.pop %v944
    %v946 = vmul.f32 %v907, 1.442695
    %v947 = vpow.pop %v946
    %v948 = vmul.f32 %v908, 1.442695
    %v949 = vpow.pop %v948
    %v950 = vmul.f32 %v909, 1.442695
    %v951 = vpow.pop %v950
    %v952 = vmul.f32 %v910, 1.442695
    %v953 = vpow.pop %v952
    %v954 = vmul.f32 %v911, 1.442695
    %v955 = vpow.pop %v954
    %v956 = vmul.f32 %v912, 1.442695
    %v957 = vpow.pop %v956
    %v958 = vmul.f32 %v913, 1.442695
    %v959 = vpow.pop %v958
    %v960 = vmul.f32 %v914, 1.442695
    %v961 = vpow.pop %v960
    %v962 = vmul.f32 %v915, 1.442695
    %v963 = vpow.pop %v962
    %v964 = vmul.f32 %v916, 1.442695
    %v965 = vpow.pop %v964
    %v966 = vmul.f32 %v917, 1.442695
    %v967 = vpow.pop %v966
    %v968 = vmul.f32 %v918, 1.442695
    %v969 = vpow.pop %v968
    %v970 = vmul.f32 %v919, 1.442695
    %v971 = vpow.pop %v970
    %v972 = vmul.f32 %v920, 1.442695
    %v973 = vpow.pop %v972
    %v974 = vmul.f32 %v921, 1.442695
    %v975 = vpow.pop %v974
    %v976 = vmul.f32 %v922, 1.442695
    %v977 = vpow.pop %v976
    %v978 = vmul.f32 %v923, 1.442695
    %v979 = vpow.pop %v978
    %v980 = vmul.f32 %v924, 1.442695
    %v981 = vpow.pop %v980
    %v982 = vmul.f32 %v925, 1.442695
    %v983 = vpow.pop %v982
    %v984 = vmul.f32 %v926, 1.442695
    %v985 = vpow.pop %v984
    %v986 = vmul.f32 %v927, 1.442695
    %v987 = vpow.pop %v986
    %v988 = vmul.f32 %v928, 1.442695
    %v989 = vpow.pop %v988
    %v990 = vmul.f32 %v929, 1.442695
    %v991 = vpow.pop %v990
    %v992 = vmul.f32 %v930, 1.442695
    %v993 = vpow.pop %v992
    %v994 = vmul.f32 %v931, 1.442695
    %v995 = vpow.pop %v994
    %v996 = vadd.f32 %v933, 2.0
    %v997 = vadd.f32 %v935, 2.0
    %v998 = vadd.f32 %v937, 2.0
    %v999 = vadd.f32 %v939, 2.0
    %v1000 = vadd.f32 %v941, 2.0
    %v1001 = vadd.f32 %v943, 2.0
    %v1002 = vadd.f32 %v945, 2.0
    %v1003 = vadd.f32 %v947, 2.0
    %v1004 = vadd.f32 %v949, 2.0
    %v1005 = vadd.f32 %v951, 2.0
    %v1006 = vadd.f32 %v953, 2.0
    %v1007 = vadd.f32 %v955, 2.0
    %v1008 = vadd.f32 %v957, 2.0
    %v1009 = vadd.f32 %v959, 2.0
    %v1010 = vadd.f32 %v961, 2.0
    %v1011 = vadd.f32 %v963, 2.0
    %v1012 = vadd.f32 %v965, 2.0
    %v1013 = vadd.f32 %v967, 2.0
    %v1014 = vadd.f32 %v969, 2.0
    %v1015 = vadd.f32 %v971, 2.0
    %v1016 = vadd.f32 %v973, 2.0
    %v1017 = vadd.f32 %v975, 2.0
    %v1018 = vadd.f32 %v977, 2.0
    %v1019 = vadd.f32 %v979, 2.0
    %v1020 = vadd.f32 %v981, 2.0
    %v1021 = vadd.f32 %v983, 2.0
    %v1022 = vadd.f32 %v985, 2.0
    %v1023 = vadd.f32 %v987, 2.0
    %v1024 = vadd.f32 %v989, 2.0
    %v1025 = vadd.f32 %v991, 2.0
    %v1026 = vadd.f32 %v993, 2.0
    %v1027 = vadd.f32 %v995, 2.0
    %v1028 = vmul.f32 %v933, %v996
    %v1029 = vmul.f32 %v935, %v997
    %v1030 = vmul.f32 %v937, %v998
    %v1031 = vmul.f32 %v939, %v999
    %v1032 = vmul.f32 %v941, %v1000
    %v1033 = vmul.f32 %v943, %v1001
    %v1034 = vmul.f32 %v945, %v1002
    %v1035 = vmul.f32 %v947, %v1003
    %v1036 = vmul.f32 %v949, %v1004
    %v1037 = vmul.f32 %v951, %v1005
    %v1038 = vmul.f32 %v953, %v1006
    %v1039 = vmul.f32 %v955, %v1007
    %v1040 = vmul.f32 %v957, %v1008
    %v1041 = vmul.f32 %v959, %v1009
    %v1042 = vmul.f32 %v961, %v1010
    %v1043 = vmul.f32 %v963, %v1011
    %v1044 = vmul.f32 %v965, %v1012
    %v1045 = vmul.f32 %v967, %v1013
    %v1046 = vmul.f32 %v969, %v1014
    %v1047 = vmul.f32 %v971, %v1015
    %v1048 = vmul.f32 %v973, %v1016
    %v1049 = vmul.f32 %v975, %v1017
    %v1050 = vmul.f32 %v977, %v1018
    %v1051 = vmul.f32 %v979, %v1019
    %v1052 = vmul.f32 %v981, %v1020
    %v1053 = vmul.f32 %v983, %v1021
    %v1054 = vmul.f32 %v985, %v1022
    %v1055 = vmul.f32 %v987, %v1023
    %v1056 = vmul.f32 %v989, %v1024
    %v1057 = vmul.f32 %v991, %v1025
    %v1058 = vmul.f32 %v993, %v1026
    %v1059 = vmul.f32 %v995, %v1027
    %v1060 = vmul.f32 %v723, %v1028
    %v1061 = vmul.f32 %v725, %v1029
    %v1062 = vmul.f32 %v776, %v1030
    %v1063 = vmul.f32 %v778, %v1031
    %v1064 = vmul.f32 %v829, %v1032
    %v1065 = vmul.f32 %v831, %v1033
    %v1066 = vmul.f32 %v882, %v1034
    %v1067 = vmul.f32 %v884, %v1035
    %v1068 = vmul.f32 %v727, %v1036
    %v1069 = vmul.f32 %v729, %v1037
    %v1070 = vmul.f32 %v780, %v1038
    %v1071 = vmul.f32 %v782, %v1039
    %v1072 = vmul.f32 %v833, %v1040
    %v1073 = vmul.f32 %v835, %v1041
    %v1074 = vmul.f32 %v886, %v1042
    %v1075 = vmul.f32 %v888, %v1043
    %v1076 = vmul.f32 %v733, %v1044
    %v1077 = vmul.f32 %v735, %v1045
    %v1078 = vmul.f32 %v786, %v1046
    %v1079 = vmul.f32 %v788, %v1047
    %v1080 = vmul.f32 %v839, %v1048
    %v1081 = vmul.f32 %v841, %v1049
    %v1082 = vmul.f32 %v892, %v1050
    %v1083 = vmul.f32 %v894, %v1051
    %v1084 = vmul.f32 %v737, %v1052
    %v1085 = vmul.f32 %v739, %v1053
    %v1086 = vmul.f32 %v790, %v1054
    %v1087 = vmul.f32 %v792, %v1055
    %v1088 = vmul.f32 %v843, %v1056
    %v1089 = vmul.f32 %v845, %v1057
    %v1090 = vmul.f32 %v896, %v1058
    %v1091 = vmul.f32 %v898, %v1059
    %v1092 = vadd.f32 %v1028, 2.0
    %v1093 = vadd.f32 %v1029, 2.0
    %v1094 = vadd.f32 %v1030, 2.0
    %v1095 = vadd.f32 %v1031, 2.0
    %v1096 = vadd.f32 %v1032, 2.0
    %v1097 = vadd.f32 %v1033, 2.0
    %v1098 = vadd.f32 %v1034, 2.0
    %v1099 = vadd.f32 %v1035, 2.0
    %v1100 = vadd.f32 %v1036, 2.0
    %v1101 = vadd.f32 %v1037, 2.0
    %v1102 = vadd.f32 %v1038, 2.0
    %v1103 = vadd.f32 %v1039, 2.0
    %v1104 = vadd.f32 %v1040, 2.0
    %v1105 = vadd.f32 %v1041, 2.0
    %v1106 = vadd.f32 %v1042, 2.0
    %v1107 = vadd.f32 %v1043, 2.0
    %v1108 = vadd.f32 %v1044, 2.0
    %v1109 = vadd.f32 %v1045, 2.0
    %v1110 = vadd.f32 %v1046, 2.0
    %v1111 = vadd.f32 %v1047, 2.0
    %v1112 = vadd.f32 %v1048, 2.0
    %v1113 = vadd.f32 %v1049, 2.0
    %v1114 = vadd.f32 %v1050, 2.0
    %v1115 = vadd.f32 %v1051, 2.0
    %v1116 = vadd.f32 %v1052, 2.0
    %v1117 = vadd.f32 %v1053, 2.0
    %v1118 = vadd.f32 %v1054, 2.0
    %v1119 = vadd.f32 %v1055, 2.0
    %v1120 = vadd.f32 %v1056, 2.0
    %v1121 = vadd.f32 %v1057, 2.0
    %v1122 = vadd.f32 %v1058, 2.0
    %v1123 = vadd.f32 %v1059, 2.0
    %v1124 = vrcp.pop %v1092
    %v1125 = vrcp.pop %v1093
    %v1126 = vrcp.pop %v1094
    %v1127 = vrcp.pop %v1095
    %v1128 = vrcp.pop %v1096
    %v1129 = vrcp.pop %v1097
    %v1130 = vrcp.pop %v1098
    %v1131 = vrcp.pop %v1099
    %v1132 = vrcp.pop %v1100
    %v1133 = vrcp.pop %v1101
    %v1134 = vrcp.pop %v1102
    %v1135 = vrcp.pop %v1103
    %v1136 = vrcp.pop %v1104
    %v1137 = vrcp.pop %v1105
    %v1138 = vrcp.pop %v1106
    %v1139 = vrcp.pop %v1107
    %v1140 = vrcp.pop %v1108
    %v1141 = vrcp.pop %v1109
    %v1142 = vrcp.pop %v1110
    %v1143 = vrcp.pop %v1111
    %v1144 = vrcp.pop %v1112
    %v1145 = vrcp.pop %v1113
    %v1146 = vrcp.pop %v1114
    %v1147 = vrcp.pop %v1115
    %v1148 = vrcp.pop %v1116
    %v1149 = vrcp.pop %v1117
    %v1150 = vrcp.pop %v1118
    %v1151 = vrcp.pop %v1119
    %v1152 = vrcp.pop %v1120
    %v1153 = vrcp.pop %v1121
    %v1154 = vrcp.pop %v1122
    %v1155 = vrcp.pop %v1123
    %v1156 = vmul.f32 %v1060, %v1124
    %v1157 = vmul.f32 %v1061, %v1125
    %v1158 = vmul.f32 %v1062, %v1126
    %v1159 = vmul.f32 %v1063, %v1127
    %v1160 = vmul.f32 %v1064, %v1128
    %v1161 = vmul.f32 %v1065, %v1129
    %v1162 = vmul.f32 %v1066, %v1130
    %v1163 = vmul.f32 %v1067, %v1131
    %v1164 = vmul.f32 %v1068, %v1132
    %v1165 = vmul.f32 %v1069, %v1133
    %v1166 = vmul.f32 %v1070, %v1134
    %v1167 = vmul.f32 %v1071, %v1135
    %v1168 = vmul.f32 %v1072, %v1136
    %v1169 = vmul.f32 %v1073, %v1137
    %v1170 = vmul.f32 %v1074, %v1138
    %v1171 = vmul.f32 %v1075, %v1139
    %v1172 = vmul.f32 %v1076, %v1140
    %v1173 = vmul.f32 %v1077, %v1141
    %v1174 = vmul.f32 %v1078, %v1142
    %v1175 = vmul.f32 %v1079, %v1143
    %v1176 = vmul.f32 %v1080, %v1144
    %v1177 = vmul.f32 %v1081, %v1145
    %v1178 = vmul.f32 %v1082, %v1146
    %v1179 = vmul.f32 %v1083, %v1147
    %v1180 = vmul.f32 %v1084, %v1148
    %v1181 = vmul.f32 %v1085, %v1149
    %v1182 = vmul.f32 %v1086, %v1150
    %v1183 = vmul.f32 %v1087, %v1151
    %v1184 = vmul.f32 %v1088, %v1152
    %v1185 = vmul.f32 %v1089, %v1153
    %v1186 = vmul.f32 %v1090, %v1154
    %v1187 = vmul.f32 %v1091, %v1155
    %v1188 = vld [vmem:[%s5] sm:$0xf]
    %v1189 = vld [vmem:[%s5 + $0x4] sm:$0xf]
    %v1190 = vld [vmem:[%s5 + $0x8] sm:$0xf]
    %v1191 = vld [vmem:[%s5 + $0xc] sm:$0xf]
    %v1192 = vpack.c.bf16 %v1164, %v1156
    %v1193 = vpack.c.bf16 %v1165, %v1157
    %v1194 = vpack.c.bf16 %v1166, %v1158
    %v1195 = vpack.c.bf16 %v1167, %v1159
    %v1196 = vpack.c.bf16 %v1168, %v1160
    %v1197 = vpack.c.bf16 %v1169, %v1161
    %v1198 = vpack.c.bf16 %v1170, %v1162
    %v1199 = vpack.c.bf16 %v1171, %v1163
    %v1200 = vpack.c.bf16 %v1180, %v1172
    %v1201 = vpack.c.bf16 %v1181, %v1173
    %v1202 = vpack.c.bf16 %v1182, %v1174
    %v1203 = vpack.c.bf16 %v1183, %v1175
    %v1204 = vpack.c.bf16 %v1184, %v1176
    %v1205 = vpack.c.bf16 %v1185, %v1177
    %v1206 = vpack.c.bf16 %v1186, %v1178
    %v1207 = vpack.c.bf16 %v1187, %v1179
    %v1208 = vld [vmem:[%s6] sm:$0xff]
    %v1209 = vld [vmem:[%s6 + $0x8] sm:$0xff]
    %v1210 = vld [vmem:[%s6 + $0x10] sm:$0xff]
    %v1211 = vld [vmem:[%s6 + $0x18] sm:$0xff]
    %1213 = vset.pattern.permute.xlu0 0
    %1214 = vperm.xlu0 %1213, %v1208
    %v1215 = vpop.permute.xlu0 %1214
    %1218 = vset.pattern.permute.xlu0 0
    %1219 = vperm.xlu0 %1218, %v1209
    %v1220 = vpop.permute.xlu0 %1219
    %1223 = vset.pattern.permute.xlu0 0
    %1224 = vperm.xlu0 %1223, %v1210
    %v1225 = vpop.permute.xlu0 %1224
    %1228 = vset.pattern.permute.xlu0 0
    %1229 = vperm.xlu0 %1228, %v1211
    %v1230 = vpop.permute.xlu0 %1229
    %v1236 = vunpack.c.l.b16 %v1188
    %v1237 = vunpack.c.l.b16 %v1189
    %v1238 = vunpack.c.l.b16 %v1190
    %v1239 = vunpack.c.l.b16 %v1191
    %v1240 = vpack.c.b16 %v1237, %v1236
    %v1241 = vpack.c.b16 %v1239, %v1238
    %v1243 = vsel %vm681, %v1240, 0
    %v1246 = vsel %vm681, %v1241, 0
    %1248 = vmatprep.subr.bf16.mxu0 %v1193
    %1249 = vmatpush1.bf16.msra.mxu0 %v1192
    %1250 = vmatprep.subr.bf16.mxu0 %v1201
    %1251 = vmatpush1.bf16.msra.mxu0 %v1200
    %1252 = vmatprep.subr.bf16.mxu0 0
    %1253 = vmatpush1.bf16.msra.mxu0 0
    %1254 = vmatprep.subr.bf16.mxu0 0
    %1255 = vmatpush1.bf16.msra.mxu0 0
    %1256 = vmatprep.subr.bf16.mxu0 0
    %1257 = vmatpush1.bf16.msra.mxu0 0
    %1258 = vmatprep.subr.bf16.mxu0 0
    %1259 = vmatpush1.bf16.msra.mxu0 0
    %1260 = vmatprep.subr.bf16.mxu0 0
    %1261 = vmatpush1.bf16.msra.mxu0 0
    %1262 = vmatprep.subr.bf16.mxu0 0
    %1263 = vmatpush1.bf16.msra.mxu0 0
    %1264 = vmatprep.subr.bf16.mxu0 0
    %1265 = vmatpush1.bf16.msra.mxu0 0
    %1266 = vmatprep.subr.bf16.mxu0 0
    %1267 = vmatpush1.bf16.msra.mxu0 0
    %1268 = vmatprep.subr.bf16.mxu0 0
    %1269 = vmatpush1.bf16.msra.mxu0 0
    %1270 = vmatprep.subr.bf16.mxu0 0
    %1271 = vmatpush1.bf16.msra.mxu0 0
    %1272 = vmatprep.subr.bf16.mxu0 0
    %1273 = vmatpush1.bf16.msra.mxu0 0
    %1274 = vmatprep.subr.bf16.mxu0 0
    %1275 = vmatpush1.bf16.msra.mxu0 0
    %1276 = vmatprep.subr.bf16.mxu0 0
    %1277 = vmatpush1.bf16.msra.mxu0 0
    %1278 = vmatprep.subr.bf16.mxu0 0
    %1279 = vmatpush1.bf16.msra.mxu0 0
    %1280 = vmatprep.mubr.bf16.mxu0 0
    %1281 = vmatmul.mubr.bf16.gmra.mrb[0].mxu0 %v1243
    %v1282 = vpop.f32.mrb[0].mxu0
    %v1283 = vadd.f32 %v1215, %v1282
    %v1284 = vpop.f32.mrb[0].mxu0
    %v1285 = vadd.f32 %v1215, %v1284
    %v1286 = vpop.f32.mrb[0].mxu0
    %v1287 = vadd.f32 %v1220, %v1286
    %v1288 = vpop.f32.mrb[0].mxu0
    %v1289 = vadd.f32 %v1220, %v1288
    %1290 = vmatprep.mubr.bf16.mxu0 0
    %1291 = vmatmul.mubr.bf16.gmra.mrb[0].mxu0 %v1246
    %v1292 = vpop.f32.mrb[0].mxu0
    %v1293 = vadd.f32 %v1225, %v1292
    %v1294 = vpop.f32.mrb[0].mxu0
    %v1295 = vadd.f32 %v1225, %v1294
    %v1296 = vpop.f32.mrb[0].mxu0
    %v1297 = vadd.f32 %v1230, %v1296
    %v1298 = vpop.f32.mrb[0].mxu0
    %v1299 = vadd.f32 %v1230, %v1298
    %1300 = vdwg.mxu0
    %1301 = vmatprep.subr.bf16.mxu0 %v1195
    %1302 = vmatpush1.bf16.msra.mxu0 %v1194
    %1303 = vmatprep.subr.bf16.mxu0 %v1203
    %1304 = vmatpush1.bf16.msra.mxu0 %v1202
    %1305 = vmatprep.subr.bf16.mxu0 0
    %1306 = vmatpush1.bf16.msra.mxu0 0
    %1307 = vmatprep.subr.bf16.mxu0 0
    %1308 = vmatpush1.bf16.msra.mxu0 0
    %1309 = vmatprep.subr.bf16.mxu0 0
    %1310 = vmatpush1.bf16.msra.mxu0 0
    %1311 = vmatprep.subr.bf16.mxu0 0
    %1312 = vmatpush1.bf16.msra.mxu0 0
    %1313 = vmatprep.subr.bf16.mxu0 0
    %1314 = vmatpush1.bf16.msra.mxu0 0
    %1315 = vmatprep.subr.bf16.mxu0 0
    %1316 = vmatpush1.bf16.msra.mxu0 0
    %1317 = vmatprep.subr.bf16.mxu0 0
    %1318 = vmatpush1.bf16.msra.mxu0 0
    %1319 = vmatprep.subr.bf16.mxu0 0
    %1320 = vmatpush1.bf16.msra.mxu0 0
    %1321 = vmatprep.subr.bf16.mxu0 0
    %1322 = vmatpush1.bf16.msra.mxu0 0
    %1323 = vmatprep.subr.bf16.mxu0 0
    %1324 = vmatpush1.bf16.msra.mxu0 0
    %1325 = vmatprep.subr.bf16.mxu0 0
    %1326 = vmatpush1.bf16.msra.mxu0 0
    %1327 = vmatprep.subr.bf16.mxu0 0
    %1328 = vmatpush1.bf16.msra.mxu0 0
    %1329 = vmatprep.subr.bf16.mxu0 0
    %1330 = vmatpush1.bf16.msra.mxu0 0
    %1331 = vmatprep.subr.bf16.mxu0 0
    %1332 = vmatpush1.bf16.msra.mxu0 0
    %1333 = vmatprep.mubr.bf16.mxu0 0
    %1334 = vmatmul.mubr.bf16.gmra.mrb[0].mxu0 %v1243
    %v1335 = vpop.f32.mrb[0].mxu0
    %v1336 = vadd.f32 %v1215, %v1335
    %v1337 = vpop.f32.mrb[0].mxu0
    %v1338 = vadd.f32 %v1215, %v1337
    %v1339 = vpop.f32.mrb[0].mxu0
    %v1340 = vadd.f32 %v1220, %v1339
    %v1341 = vpop.f32.mrb[0].mxu0
    %v1342 = vadd.f32 %v1220, %v1341
    %1343 = vmatprep.mubr.bf16.mxu0 0
    %1344 = vmatmul.mubr.bf16.gmra.mrb[0].mxu0 %v1246
    %v1345 = vpop.f32.mrb[0].mxu0
    %v1346 = vadd.f32 %v1225, %v1345
    %v1347 = vpop.f32.mrb[0].mxu0
    %v1348 = vadd.f32 %v1225, %v1347
    %v1349 = vpop.f32.mrb[0].mxu0
    %v1350 = vadd.f32 %v1230, %v1349
    %v1351 = vpop.f32.mrb[0].mxu0
    %v1352 = vadd.f32 %v1230, %v1351
    %1353 = vdwg.mxu0
    %1354 = vmatprep.subr.bf16.mxu0 %v1197
    %1355 = vmatpush1.bf16.msra.mxu0 %v1196
    %1356 = vmatprep.subr.bf16.mxu0 %v1205
    %1357 = vmatpush1.bf16.msra.mxu0 %v1204
    %1358 = vmatprep.subr.bf16.mxu0 0
    %1359 = vmatpush1.bf16.msra.mxu0 0
    %1360 = vmatprep.subr.bf16.mxu0 0
    %1361 = vmatpush1.bf16.msra.mxu0 0
    %1362 = vmatprep.subr.bf16.mxu0 0
    %1363 = vmatpush1.bf16.msra.mxu0 0
    %1364 = vmatprep.subr.bf16.mxu0 0
    %1365 = vmatpush1.bf16.msra.mxu0 0
    %1366 = vmatprep.subr.bf16.mxu0 0
    %1367 = vmatpush1.bf16.msra.mxu0 0
    %1368 = vmatprep.subr.bf16.mxu0 0
    %1369 = vmatpush1.bf16.msra.mxu0 0
    %1370 = vmatprep.subr.bf16.mxu0 0
    %1371 = vmatpush1.bf16.msra.mxu0 0
    %1372 = vmatprep.subr.bf16.mxu0 0
    %1373 = vmatpush1.bf16.msra.mxu0 0
    %1374 = vmatprep.subr.bf16.mxu0 0
    %1375 = vmatpush1.bf16.msra.mxu0 0
    %1376 = vmatprep.subr.bf16.mxu0 0
    %1377 = vmatpush1.bf16.msra.mxu0 0
    %1378 = vmatprep.subr.bf16.mxu0 0
    %1379 = vmatpush1.bf16.msra.mxu0 0
    %1380 = vmatprep.subr.bf16.mxu0 0
    %1381 = vmatpush1.bf16.msra.mxu0 0
    %1382 = vmatprep.subr.bf16.mxu0 0
    %1383 = vmatpush1.bf16.msra.mxu0 0
    %1384 = vmatprep.subr.bf16.mxu0 0
    %1385 = vmatpush1.bf16.msra.mxu0 0
    %1386 = vmatprep.mubr.bf16.mxu0 0
    %1387 = vmatmul.mubr.bf16.gmra.mrb[0].mxu0 %v1243
    %v1388 = vpop.f32.mrb[0].mxu0
    %v1389 = vadd.f32 %v1215, %v1388
    %v1390 = vpop.f32.mrb[0].mxu0
    %v1391 = vadd.f32 %v1215, %v1390
    %v1392 = vpop.f32.mrb[0].mxu0
    %v1393 = vadd.f32 %v1220, %v1392
    %v1394 = vpop.f32.mrb[0].mxu0
    %v1395 = vadd.f32 %v1220, %v1394
    %1396 = vmatprep.mubr.bf16.mxu0 0
    %1397 = vmatmul.mubr.bf16.gmra.mrb[0].mxu0 %v1246
    %v1398 = vpop.f32.mrb[0].mxu0
    %v1399 = vadd.f32 %v1225, %v1398
    %v1400 = vpop.f32.mrb[0].mxu0
    %v1401 = vadd.f32 %v1225, %v1400
    %v1402 = vpop.f32.mrb[0].mxu0
    %v1403 = vadd.f32 %v1230, %v1402
    %v1404 = vpop.f32.mrb[0].mxu0
    %v1405 = vadd.f32 %v1230, %v1404
    %1406 = vdwg.mxu0
    %1407 = vmatprep.subr.bf16.mxu0 %v1199
    %1408 = vmatpush1.bf16.msra.mxu0 %v1198
    %1409 = vmatprep.subr.bf16.mxu0 %v1207
    %1410 = vmatpush1.bf16.msra.mxu0 %v1206
    %1411 = vmatprep.subr.bf16.mxu0 0
    %1412 = vmatpush1.bf16.msra.mxu0 0
    %1413 = vmatprep.subr.bf16.mxu0 0
    %1414 = vmatpush1.bf16.msra.mxu0 0
    %1415 = vmatprep.subr.bf16.mxu0 0
    %1416 = vmatpush1.bf16.msra.mxu0 0
    %1417 = vmatprep.subr.bf16.mxu0 0
    %1418 = vmatpush1.bf16.msra.mxu0 0
    %1419 = vmatprep.subr.bf16.mxu0 0
    %1420 = vmatpush1.bf16.msra.mxu0 0
    %1421 = vmatprep.subr.bf16.mxu0 0
    %1422 = vmatpush1.bf16.msra.mxu0 0
    %1423 = vmatprep.subr.bf16.mxu0 0
    %1424 = vmatpush1.bf16.msra.mxu0 0
    %1425 = vmatprep.subr.bf16.mxu0 0
    %1426 = vmatpush1.bf16.msra.mxu0 0
    %1427 = vmatprep.subr.bf16.mxu0 0
    %1428 = vmatpush1.bf16.msra.mxu0 0
    %1429 = vmatprep.subr.bf16.mxu0 0
    %1430 = vmatpush1.bf16.msra.mxu0 0
    %1431 = vmatprep.subr.bf16.mxu0 0
    %1432 = vmatpush1.bf16.msra.mxu0 0
    %1433 = vmatprep.subr.bf16.mxu0 0
    %1434 = vmatpush1.bf16.msra.mxu0 0
    %1435 = vmatprep.subr.bf16.mxu0 0
    %1436 = vmatpush1.bf16.msra.mxu0 0
    %1437 = vmatprep.subr.bf16.mxu0 0
    %1438 = vmatpush1.bf16.msra.mxu0 0
    %1439 = vmatprep.mubr.bf16.mxu0 0
    %1440 = vmatmul.mubr.bf16.gmra.mrb[0].mxu0 %v1243
    %v1441 = vpop.f32.mrb[0].mxu0
    %v1442 = vadd.f32 %v1215, %v1441
    %v1443 = vpop.f32.mrb[0].mxu0
    %v1444 = vadd.f32 %v1215, %v1443
    %v1445 = vpop.f32.mrb[0].mxu0
    %v1446 = vadd.f32 %v1220, %v1445
    %v1447 = vpop.f32.mrb[0].mxu0
    %v1448 = vadd.f32 %v1220, %v1447
    %1449 = vmatprep.mubr.bf16.mxu0 0
    %1450 = vmatmul.mubr.bf16.gmra.mrb[0].mxu0 %v1246
    %v1451 = vpop.f32.mrb[0].mxu0
    %v1452 = vadd.f32 %v1225, %v1451
    %v1453 = vpop.f32.mrb[0].mxu0
    %v1454 = vadd.f32 %v1225, %v1453
    %v1455 = vpop.f32.mrb[0].mxu0
    %v1456 = vadd.f32 %v1230, %v1455
    %v1457 = vpop.f32.mrb[0].mxu0
    %v1458 = vadd.f32 %v1230, %v1457
    %1459 = vdwg.mxu0
    %v1460 = vadd.f32 %v1283, %v162
    %v1461 = vadd.f32 %v1285, %v164
    %v1462 = vadd.f32 %v1336, %v215
    %v1463 = vadd.f32 %v1338, %v217
    %v1464 = vadd.f32 %v1389, %v268
    %v1465 = vadd.f32 %v1391, %v270
    %v1466 = vadd.f32 %v1442, %v321
    %v1467 = vadd.f32 %v1444, %v323
    %v1468 = vadd.f32 %v1287, %v166
    %v1469 = vadd.f32 %v1289, %v168
    %v1470 = vadd.f32 %v1340, %v219
    %v1471 = vadd.f32 %v1342, %v221
    %v1472 = vadd.f32 %v1393, %v272
    %v1473 = vadd.f32 %v1395, %v274
    %v1474 = vadd.f32 %v1446, %v325
    %v1475 = vadd.f32 %v1448, %v327
    %v1476 = vadd.f32 %v1293, %v172
    %v1477 = vadd.f32 %v1295, %v174
    %v1478 = vadd.f32 %v1346, %v225
    %v1479 = vadd.f32 %v1348, %v227
    %v1480 = vadd.f32 %v1399, %v278
    %v1481 = vadd.f32 %v1401, %v280
    %v1482 = vadd.f32 %v1452, %v331
    %v1483 = vadd.f32 %v1454, %v333
    %v1484 = vadd.f32 %v1297, %v176
    %v1485 = vadd.f32 %v1299, %v178
    %v1486 = vadd.f32 %v1350, %v229
    %v1487 = vadd.f32 %v1352, %v231
    %v1488 = vadd.f32 %v1403, %v282
    %v1489 = vadd.f32 %v1405, %v284
    %v1490 = vadd.f32 %v1456, %v335
    %v1491 = vadd.f32 %v1458, %v337
    %v1492 = vmin.f32 %v1460, 20.0
    %v1493 = vmin.f32 %v1461, 20.0
    %v1494 = vmin.f32 %v1462, 20.0
    %v1495 = vmin.f32 %v1463, 20.0
    %v1496 = vmin.f32 %v1464, 20.0
    %v1497 = vmin.f32 %v1465, 20.0
    %v1498 = vmin.f32 %v1466, 20.0
    %v1499 = vmin.f32 %v1467, 20.0
    %v1500 = vmin.f32 %v1468, 20.0
    %v1501 = vmin.f32 %v1469, 20.0
    %v1502 = vmin.f32 %v1470, 20.0
    %v1503 = vmin.f32 %v1471, 20.0
    %v1504 = vmin.f32 %v1472, 20.0
    %v1505 = vmin.f32 %v1473, 20.0
    %v1506 = vmin.f32 %v1474, 20.0
    %v1507 = vmin.f32 %v1475, 20.0
    %v1508 = vmin.f32 %v1476, 20.0
    %v1509 = vmin.f32 %v1477, 20.0
    %v1510 = vmin.f32 %v1478, 20.0
    %v1511 = vmin.f32 %v1479, 20.0
    %v1512 = vmin.f32 %v1480, 20.0
    %v1513 = vmin.f32 %v1481, 20.0
    %v1514 = vmin.f32 %v1482, 20.0
    %v1515 = vmin.f32 %v1483, 20.0
    %v1516 = vmin.f32 %v1484, 20.0
    %v1517 = vmin.f32 %v1485, 20.0
    %v1518 = vmin.f32 %v1486, 20.0
    %v1519 = vmin.f32 %v1487, 20.0
    %v1520 = vmin.f32 %v1488, 20.0
    %v1521 = vmin.f32 %v1489, 20.0
    %v1522 = vmin.f32 %v1490, 20.0
    %v1523 = vmin.f32 %v1491, 20.0
    %v1524 = vmul.f32 %v1492, 1.442695
    %v1525 = vpow.pop %v1524
    %v1526 = vmul.f32 %v1493, 1.442695
    %v1527 = vpow.pop %v1526
    %v1528 = vmul.f32 %v1494, 1.442695
    %v1529 = vpow.pop %v1528
    %v1530 = vmul.f32 %v1495, 1.442695
    %v1531 = vpow.pop %v1530
    %v1532 = vmul.f32 %v1496, 1.442695
    %v1533 = vpow.pop %v1532
    %v1534 = vmul.f32 %v1497, 1.442695
    %v1535 = vpow.pop %v1534
    %v1536 = vmul.f32 %v1498, 1.442695
    %v1537 = vpow.pop %v1536
    %v1538 = vmul.f32 %v1499, 1.442695
    %v1539 = vpow.pop %v1538
    %v1540 = vmul.f32 %v1500, 1.442695
    %v1541 = vpow.pop %v1540
    %v1542 = vmul.f32 %v1501, 1.442695
    %v1543 = vpow.pop %v1542
    %v1544 = vmul.f32 %v1502, 1.442695
    %v1545 = vpow.pop %v1544
    %v1546 = vmul.f32 %v1503, 1.442695
    %v1547 = vpow.pop %v1546
    %v1548 = vmul.f32 %v1504, 1.442695
    %v1549 = vpow.pop %v1548
    %v1550 = vmul.f32 %v1505, 1.442695
    %v1551 = vpow.pop %v1550
    %v1552 = vmul.f32 %v1506, 1.442695
    %v1553 = vpow.pop %v1552
    %v1554 = vmul.f32 %v1507, 1.442695
    %v1555 = vpow.pop %v1554
    %v1556 = vmul.f32 %v1508, 1.442695
    %v1557 = vpow.pop %v1556
    %v1558 = vmul.f32 %v1509, 1.442695
    %v1559 = vpow.pop %v1558
    %v1560 = vmul.f32 %v1510, 1.442695
    %v1561 = vpow.pop %v1560
    %v1562 = vmul.f32 %v1511, 1.442695
    %v1563 = vpow.pop %v1562
    %v1564 = vmul.f32 %v1512, 1.442695
    %v1565 = vpow.pop %v1564
    %v1566 = vmul.f32 %v1513, 1.442695
    %v1567 = vpow.pop %v1566
    %v1568 = vmul.f32 %v1514, 1.442695
    %v1569 = vpow.pop %v1568
    %v1570 = vmul.f32 %v1515, 1.442695
    %v1571 = vpow.pop %v1570
    %v1572 = vmul.f32 %v1516, 1.442695
    %v1573 = vpow.pop %v1572
    %v1574 = vmul.f32 %v1517, 1.442695
    %v1575 = vpow.pop %v1574
    %v1576 = vmul.f32 %v1518, 1.442695
    %v1577 = vpow.pop %v1576
    %v1578 = vmul.f32 %v1519, 1.442695
    %v1579 = vpow.pop %v1578
    %v1580 = vmul.f32 %v1520, 1.442695
    %v1581 = vpow.pop %v1580
    %v1582 = vmul.f32 %v1521, 1.442695
    %v1583 = vpow.pop %v1582
    %v1584 = vmul.f32 %v1522, 1.442695
    %v1585 = vpow.pop %v1584
    %v1586 = vmul.f32 %v1523, 1.442695
    %v1587 = vpow.pop %v1586
    %v1588 = vadd.f32 %v1525, 2.0
    %v1589 = vadd.f32 %v1527, 2.0
    %v1590 = vadd.f32 %v1529, 2.0
    %v1591 = vadd.f32 %v1531, 2.0
    %v1592 = vadd.f32 %v1533, 2.0
    %v1593 = vadd.f32 %v1535, 2.0
    %v1594 = vadd.f32 %v1537, 2.0
    %v1595 = vadd.f32 %v1539, 2.0
    %v1596 = vadd.f32 %v1541, 2.0
    %v1597 = vadd.f32 %v1543, 2.0
    %v1598 = vadd.f32 %v1545, 2.0
    %v1599 = vadd.f32 %v1547, 2.0
    %v1600 = vadd.f32 %v1549, 2.0
    %v1601 = vadd.f32 %v1551, 2.0
    %v1602 = vadd.f32 %v1553, 2.0
    %v1603 = vadd.f32 %v1555, 2.0
    %v1604 = vadd.f32 %v1557, 2.0
    %v1605 = vadd.f32 %v1559, 2.0
    %v1606 = vadd.f32 %v1561, 2.0
    %v1607 = vadd.f32 %v1563, 2.0
    %v1608 = vadd.f32 %v1565, 2.0
    %v1609 = vadd.f32 %v1567, 2.0
    %v1610 = vadd.f32 %v1569, 2.0
    %v1611 = vadd.f32 %v1571, 2.0
    %v1612 = vadd.f32 %v1573, 2.0
    %v1613 = vadd.f32 %v1575, 2.0
    %v1614 = vadd.f32 %v1577, 2.0
    %v1615 = vadd.f32 %v1579, 2.0
    %v1616 = vadd.f32 %v1581, 2.0
    %v1617 = vadd.f32 %v1583, 2.0
    %v1618 = vadd.f32 %v1585, 2.0
    %v1619 = vadd.f32 %v1587, 2.0
    %v1620 = vmul.f32 %v1525, %v1588
    %v1621 = vmul.f32 %v1527, %v1589
    %v1622 = vmul.f32 %v1529, %v1590
    %v1623 = vmul.f32 %v1531, %v1591
    %v1624 = vmul.f32 %v1533, %v1592
    %v1625 = vmul.f32 %v1535, %v1593
    %v1626 = vmul.f32 %v1537, %v1594
    %v1627 = vmul.f32 %v1539, %v1595
    %v1628 = vmul.f32 %v1541, %v1596
    %v1629 = vmul.f32 %v1543, %v1597
    %v1630 = vmul.f32 %v1545, %v1598
    %v1631 = vmul.f32 %v1547, %v1599
    %v1632 = vmul.f32 %v1549, %v1600
    %v1633 = vmul.f32 %v1551, %v1601
    %v1634 = vmul.f32 %v1553, %v1602
    %v1635 = vmul.f32 %v1555, %v1603
    %v1636 = vmul.f32 %v1557, %v1604
    %v1637 = vmul.f32 %v1559, %v1605
    %v1638 = vmul.f32 %v1561, %v1606
    %v1639 = vmul.f32 %v1563, %v1607
    %v1640 = vmul.f32 %v1565, %v1608
    %v1641 = vmul.f32 %v1567, %v1609
    %v1642 = vmul.f32 %v1569, %v1610
    %v1643 = vmul.f32 %v1571, %v1611
    %v1644 = vmul.f32 %v1573, %v1612
    %v1645 = vmul.f32 %v1575, %v1613
    %v1646 = vmul.f32 %v1577, %v1614
    %v1647 = vmul.f32 %v1579, %v1615
    %v1648 = vmul.f32 %v1581, %v1616
    %v1649 = vmul.f32 %v1583, %v1617
    %v1650 = vmul.f32 %v1585, %v1618
    %v1651 = vmul.f32 %v1587, %v1619
    %v1652 = vmul.f32 %v1460, %v1620
    %v1653 = vmul.f32 %v1461, %v1621
    %v1654 = vmul.f32 %v1462, %v1622
    %v1655 = vmul.f32 %v1463, %v1623
    %v1656 = vmul.f32 %v1464, %v1624
    %v1657 = vmul.f32 %v1465, %v1625
    %v1658 = vmul.f32 %v1466, %v1626
    %v1659 = vmul.f32 %v1467, %v1627
    %v1660 = vmul.f32 %v1468, %v1628
    %v1661 = vmul.f32 %v1469, %v1629
    %v1662 = vmul.f32 %v1470, %v1630
    %v1663 = vmul.f32 %v1471, %v1631
    %v1664 = vmul.f32 %v1472, %v1632
    %v1665 = vmul.f32 %v1473, %v1633
    %v1666 = vmul.f32 %v1474, %v1634
    %v1667 = vmul.f32 %v1475, %v1635
    %v1668 = vmul.f32 %v1476, %v1636
    %v1669 = vmul.f32 %v1477, %v1637
    %v1670 = vmul.f32 %v1478, %v1638
    %v1671 = vmul.f32 %v1479, %v1639
    %v1672 = vmul.f32 %v1480, %v1640
    %v1673 = vmul.f32 %v1481, %v1641
    %v1674 = vmul.f32 %v1482, %v1642
    %v1675 = vmul.f32 %v1483, %v1643
    %v1676 = vmul.f32 %v1484, %v1644
    %v1677 = vmul.f32 %v1485, %v1645
    %v1678 = vmul.f32 %v1486, %v1646
    %v1679 = vmul.f32 %v1487, %v1647
    %v1680 = vmul.f32 %v1488, %v1648
    %v1681 = vmul.f32 %v1489, %v1649
    %v1682 = vmul.f32 %v1490, %v1650
    %v1683 = vmul.f32 %v1491, %v1651
    %v1684 = vadd.f32 %v1620, 2.0
    %v1685 = vadd.f32 %v1621, 2.0
    %v1686 = vadd.f32 %v1622, 2.0
    %v1687 = vadd.f32 %v1623, 2.0
    %v1688 = vadd.f32 %v1624, 2.0
    %v1689 = vadd.f32 %v1625, 2.0
    %v1690 = vadd.f32 %v1626, 2.0
    %v1691 = vadd.f32 %v1627, 2.0
    %v1692 = vadd.f32 %v1628, 2.0
    %v1693 = vadd.f32 %v1629, 2.0
    %v1694 = vadd.f32 %v1630, 2.0
    %v1695 = vadd.f32 %v1631, 2.0
    %v1696 = vadd.f32 %v1632, 2.0
    %v1697 = vadd.f32 %v1633, 2.0
    %v1698 = vadd.f32 %v1634, 2.0
    %v1699 = vadd.f32 %v1635, 2.0
    %v1700 = vadd.f32 %v1636, 2.0
    %v1701 = vadd.f32 %v1637, 2.0
    %v1702 = vadd.f32 %v1638, 2.0
    %v1703 = vadd.f32 %v1639, 2.0
    %v1704 = vadd.f32 %v1640, 2.0
    %v1705 = vadd.f32 %v1641, 2.0
    %v1706 = vadd.f32 %v1642, 2.0
    %v1707 = vadd.f32 %v1643, 2.0
    %v1708 = vadd.f32 %v1644, 2.0
    %v1709 = vadd.f32 %v1645, 2.0
    %v1710 = vadd.f32 %v1646, 2.0
    %v1711 = vadd.f32 %v1647, 2.0
    %v1712 = vadd.f32 %v1648, 2.0
    %v1713 = vadd.f32 %v1649, 2.0
    %v1714 = vadd.f32 %v1650, 2.0
    %v1715 = vadd.f32 %v1651, 2.0
    %v1716 = vrcp.pop %v1684
    %v1717 = vrcp.pop %v1685
    %v1718 = vrcp.pop %v1686
    %v1719 = vrcp.pop %v1687
    %v1720 = vrcp.pop %v1688
    %v1721 = vrcp.pop %v1689
    %v1722 = vrcp.pop %v1690
    %v1723 = vrcp.pop %v1691
    %v1724 = vrcp.pop %v1692
    %v1725 = vrcp.pop %v1693
    %v1726 = vrcp.pop %v1694
    %v1727 = vrcp.pop %v1695
    %v1728 = vrcp.pop %v1696
    %v1729 = vrcp.pop %v1697
    %v1730 = vrcp.pop %v1698
    %v1731 = vrcp.pop %v1699
    %v1732 = vrcp.pop %v1700
    %v1733 = vrcp.pop %v1701
    %v1734 = vrcp.pop %v1702
    %v1735 = vrcp.pop %v1703
    %v1736 = vrcp.pop %v1704
    %v1737 = vrcp.pop %v1705
    %v1738 = vrcp.pop %v1706
    %v1739 = vrcp.pop %v1707
    %v1740 = vrcp.pop %v1708
    %v1741 = vrcp.pop %v1709
    %v1742 = vrcp.pop %v1710
    %v1743 = vrcp.pop %v1711
    %v1744 = vrcp.pop %v1712
    %v1745 = vrcp.pop %v1713
    %v1746 = vrcp.pop %v1714
    %v1747 = vrcp.pop %v1715
    %v1748 = vmul.f32 %v1652, %v1716
    %v1749 = vmul.f32 %v1653, %v1717
    %v1750 = vmul.f32 %v1654, %v1718
    %v1751 = vmul.f32 %v1655, %v1719
    %v1752 = vmul.f32 %v1656, %v1720
    %v1753 = vmul.f32 %v1657, %v1721
    %v1754 = vmul.f32 %v1658, %v1722
    %v1755 = vmul.f32 %v1659, %v1723
    %v1756 = vmul.f32 %v1660, %v1724
    %v1757 = vmul.f32 %v1661, %v1725
    %v1758 = vmul.f32 %v1662, %v1726
    %v1759 = vmul.f32 %v1663, %v1727
    %v1760 = vmul.f32 %v1664, %v1728
    %v1761 = vmul.f32 %v1665, %v1729
    %v1762 = vmul.f32 %v1666, %v1730
    %v1763 = vmul.f32 %v1667, %v1731
    %v1764 = vmul.f32 %v1668, %v1732
    %v1765 = vmul.f32 %v1669, %v1733
    %v1766 = vmul.f32 %v1670, %v1734
    %v1767 = vmul.f32 %v1671, %v1735
    %v1768 = vmul.f32 %v1672, %v1736
    %v1769 = vmul.f32 %v1673, %v1737
    %v1770 = vmul.f32 %v1674, %v1738
    %v1771 = vmul.f32 %v1675, %v1739
    %v1772 = vmul.f32 %v1676, %v1740
    %v1773 = vmul.f32 %v1677, %v1741
    %v1774 = vmul.f32 %v1678, %v1742
    %v1775 = vmul.f32 %v1679, %v1743
    %v1776 = vmul.f32 %v1680, %v1744
    %v1777 = vmul.f32 %v1681, %v1745
    %v1778 = vmul.f32 %v1682, %v1746
    %v1779 = vmul.f32 %v1683, %v1747
    %s1780 = scalar_lea.vmem %s3, 16
    %v1781 = vld [vmem:[%s1780] sm:$0xf]
    %v1782 = vld [vmem:[%s1780 + $0x4] sm:$0xf]
    %v1783 = vld [vmem:[%s1780 + $0x8] sm:$0xf]
    %v1784 = vld [vmem:[%s1780 + $0xc] sm:$0xf]
    %v1785 = vpack.c.bf16 %v1756, %v1748
    %v1786 = vpack.c.bf16 %v1757, %v1749
    %v1787 = vpack.c.bf16 %v1758, %v1750
    %v1788 = vpack.c.bf16 %v1759, %v1751
    %v1789 = vpack.c.bf16 %v1760, %v1752
    %v1790 = vpack.c.bf16 %v1761, %v1753
    %v1791 = vpack.c.bf16 %v1762, %v1754
    %v1792 = vpack.c.bf16 %v1763, %v1755
    %v1793 = vpack.c.bf16 %v1772, %v1764
    %v1794 = vpack.c.bf16 %v1773, %v1765
    %v1795 = vpack.c.bf16 %v1774, %v1766
    %v1796 = vpack.c.bf16 %v1775, %v1767
    %v1797 = vpack.c.bf16 %v1776, %v1768
    %v1798 = vpack.c.bf16 %v1777, %v1769
    %v1799 = vpack.c.bf16 %v1778, %v1770
    %v1800 = vpack.c.bf16 %v1779, %v1771
    %s1801 = scalar_lea.vmem %s4, 32
    %v1802 = vld [vmem:[%s1801] sm:$0xff]
    %v1803 = vld [vmem:[%s1801 + $0x8] sm:$0xff]
    %v1804 = vld [vmem:[%s1801 + $0x10] sm:$0xff]
    %v1805 = vld [vmem:[%s1801 + $0x18] sm:$0xff]
    %1807 = vset.pattern.permute.xlu0 0
    %1808 = vperm.xlu0 %1807, %v1802
    %v1809 = vpop.permute.xlu0 %1808
    %1812 = vset.pattern.permute.xlu0 0
    %1813 = vperm.xlu0 %1812, %v1803
    %v1814 = vpop.permute.xlu0 %1813
    %1817 = vset.pattern.permute.xlu0 0
    %1818 = vperm.xlu0 %1817, %v1804
    %v1819 = vpop.permute.xlu0 %1818
    %1822 = vset.pattern.permute.xlu0 0
    %1823 = vperm.xlu0 %1822, %v1805
    %v1824 = vpop.permute.xlu0 %1823
    %v1830 = vunpack.c.l.b16 %v1781
    %v1831 = vunpack.c.l.b16 %v1782
    %v1832 = vunpack.c.l.b16 %v1783
    %v1833 = vunpack.c.l.b16 %v1784
    %v1834 = vpack.c.b16 %v1831, %v1830
    %v1835 = vpack.c.b16 %v1833, %v1832
    %v1837 = vsel %vm681, %v1834, 0
    %v1840 = vsel %vm681, %v1835, 0
    %1842 = vmatprep.subr.bf16.mxu0 %v1786
    %1843 = vmatpush1.bf16.msra.mxu0 %v1785
    %1844 = vmatprep.subr.bf16.mxu0 %v1794
    %1845 = vmatpush1.bf16.msra.mxu0 %v1793
    %1846 = vmatprep.subr.bf16.mxu0 0
    %1847 = vmatpush1.bf16.msra.mxu0 0
    %1848 = vmatprep.subr.bf16.mxu0 0
    %1849 = vmatpush1.bf16.msra.mxu0 0
    %1850 = vmatprep.subr.bf16.mxu0 0
    %1851 = vmatpush1.bf16.msra.mxu0 0
    %1852 = vmatprep.subr.bf16.mxu0 0
    %1853 = vmatpush1.bf16.msra.mxu0 0
    %1854 = vmatprep.subr.bf16.mxu0 0
    %1855 = vmatpush1.bf16.msra.mxu0 0
    %1856 = vmatprep.subr.bf16.mxu0 0
    %1857 = vmatpush1.bf16.msra.mxu0 0
    %1858 = vmatprep.subr.bf16.mxu0 0
    %1859 = vmatpush1.bf16.msra.mxu0 0
    %1860 = vmatprep.subr.bf16.mxu0 0
    %1861 = vmatpush1.bf16.msra.mxu0 0
    %1862 = vmatprep.subr.bf16.mxu0 0
    %1863 = vmatpush1.bf16.msra.mxu0 0
    %1864 = vmatprep.subr.bf16.mxu0 0
    %1865 = vmatpush1.bf16.msra.mxu0 0
    %1866 = vmatprep.subr.bf16.mxu0 0
    %1867 = vmatpush1.bf16.msra.mxu0 0
    %1868 = vmatprep.subr.bf16.mxu0 0
    %1869 = vmatpush1.bf16.msra.mxu0 0
    %1870 = vmatprep.subr.bf16.mxu0 0
    %1871 = vmatpush1.bf16.msra.mxu0 0
    %1872 = vmatprep.subr.bf16.mxu0 0
    %1873 = vmatpush1.bf16.msra.mxu0 0
    %1874 = vmatprep.mubr.bf16.mxu0 0
    %1875 = vmatmul.mubr.bf16.gmra.mrb[0].mxu0 %v1837
    %v1876 = vpop.f32.mrb[0].mxu0
    %v1877 = vadd.f32 %v1809, %v1876
    %v1878 = vpop.f32.mrb[0].mxu0
    %v1879 = vadd.f32 %v1809, %v1878
    %v1880 = vpop.f32.mrb[0].mxu0
    %v1881 = vadd.f32 %v1814, %v1880
    %v1882 = vpop.f32.mrb[0].mxu0
    %v1883 = vadd.f32 %v1814, %v1882
    %1884 = vmatprep.mubr.bf16.mxu0 0
    %1885 = vmatmul.mubr.bf16.gmra.mrb[0].mxu0 %v1840
    %v1886 = vpop.f32.mrb[0].mxu0
    %v1887 = vadd.f32 %v1819, %v1886
    %v1888 = vpop.f32.mrb[0].mxu0
    %v1889 = vadd.f32 %v1819, %v1888
    %v1890 = vpop.f32.mrb[0].mxu0
    %v1891 = vadd.f32 %v1824, %v1890
    %v1892 = vpop.f32.mrb[0].mxu0
    %v1893 = vadd.f32 %v1824, %v1892
    %1894 = vdwg.mxu0
    %1895 = vmatprep.subr.bf16.mxu0 %v1788
    %1896 = vmatpush1.bf16.msra.mxu0 %v1787
    %1897 = vmatprep.subr.bf16.mxu0 %v1796
    %1898 = vmatpush1.bf16.msra.mxu0 %v1795
    %1899 = vmatprep.subr.bf16.mxu0 0
    %1900 = vmatpush1.bf16.msra.mxu0 0
    %1901 = vmatprep.subr.bf16.mxu0 0
    %1902 = vmatpush1.bf16.msra.mxu0 0
    %1903 = vmatprep.subr.bf16.mxu0 0
    %1904 = vmatpush1.bf16.msra.mxu0 0
    %1905 = vmatprep.subr.bf16.mxu0 0
    %1906 = vmatpush1.bf16.msra.mxu0 0
    %1907 = vmatprep.subr.bf16.mxu0 0
    %1908 = vmatpush1.bf16.msra.mxu0 0
    %1909 = vmatprep.subr.bf16.mxu0 0
    %1910 = vmatpush1.bf16.msra.mxu0 0
    %1911 = vmatprep.subr.bf16.mxu0 0
    %1912 = vmatpush1.bf16.msra.mxu0 0
    %1913 = vmatprep.subr.bf16.mxu0 0
    %1914 = vmatpush1.bf16.msra.mxu0 0
    %1915 = vmatprep.subr.bf16.mxu0 0
    %1916 = vmatpush1.bf16.msra.mxu0 0
    %1917 = vmatprep.subr.bf16.mxu0 0
    %1918 = vmatpush1.bf16.msra.mxu0 0
    %1919 = vmatprep.subr.bf16.mxu0 0
    %1920 = vmatpush1.bf16.msra.mxu0 0
    %1921 = vmatprep.subr.bf16.mxu0 0
    %1922 = vmatpush1.bf16.msra.mxu0 0
    %1923 = vmatprep.subr.bf16.mxu0 0
    %1924 = vmatpush1.bf16.msra.mxu0 0
    %1925 = vmatprep.subr.bf16.mxu0 0
    %1926 = vmatpush1.bf16.msra.mxu0 0
    %1927 = vmatprep.mubr.bf16.mxu0 0
    %1928 = vmatmul.mubr.bf16.gmra.mrb[0].mxu0 %v1837
    %v1929 = vpop.f32.mrb[0].mxu0
    %v1930 = vadd.f32 %v1809, %v1929
    %v1931 = vpop.f32.mrb[0].mxu0
    %v1932 = vadd.f32 %v1809, %v1931
    %v1933 = vpop.f32.mrb[0].mxu0
    %v1934 = vadd.f32 %v1814, %v1933
    %v1935 = vpop.f32.mrb[0].mxu0
    %v1936 = vadd.f32 %v1814, %v1935
    %1937 = vmatprep.mubr.bf16.mxu0 0
    %1938 = vmatmul.mubr.bf16.gmra.mrb[0].mxu0 %v1840
    %v1939 = vpop.f32.mrb[0].mxu0
    %v1940 = vadd.f32 %v1819, %v1939
    %v1941 = vpop.f32.mrb[0].mxu0
    %v1942 = vadd.f32 %v1819, %v1941
    %v1943 = vpop.f32.mrb[0].mxu0
    %v1944 = vadd.f32 %v1824, %v1943
    %v1945 = vpop.f32.mrb[0].mxu0
    %v1946 = vadd.f32 %v1824, %v1945
    %1947 = vdwg.mxu0
    %1948 = vmatprep.subr.bf16.mxu0 %v1790
    %1949 = vmatpush1.bf16.msra.mxu0 %v1789
    %1950 = vmatprep.subr.bf16.mxu0 %v1798
    %1951 = vmatpush1.bf16.msra.mxu0 %v1797
    %1952 = vmatprep.subr.bf16.mxu0 0
    %1953 = vmatpush1.bf16.msra.mxu0 0
    %1954 = vmatprep.subr.bf16.mxu0 0
    %1955 = vmatpush1.bf16.msra.mxu0 0
    %1956 = vmatprep.subr.bf16.mxu0 0
    %1957 = vmatpush1.bf16.msra.mxu0 0
    %1958 = vmatprep.subr.bf16.mxu0 0
    %1959 = vmatpush1.bf16.msra.mxu0 0
    %1960 = vmatprep.subr.bf16.mxu0 0
    %1961 = vmatpush1.bf16.msra.mxu0 0
    %1962 = vmatprep.subr.bf16.mxu0 0
    %1963 = vmatpush1.bf16.msra.mxu0 0
    %1964 = vmatprep.subr.bf16.mxu0 0
    %1965 = vmatpush1.bf16.msra.mxu0 0
    %1966 = vmatprep.subr.bf16.mxu0 0
    %1967 = vmatpush1.bf16.msra.mxu0 0
    %1968 = vmatprep.subr.bf16.mxu0 0
    %1969 = vmatpush1.bf16.msra.mxu0 0
    %1970 = vmatprep.subr.bf16.mxu0 0
    %1971 = vmatpush1.bf16.msra.mxu0 0
    %1972 = vmatprep.subr.bf16.mxu0 0
    %1973 = vmatpush1.bf16.msra.mxu0 0
    %1974 = vmatprep.subr.bf16.mxu0 0
    %1975 = vmatpush1.bf16.msra.mxu0 0
    %1976 = vmatprep.subr.bf16.mxu0 0
    %1977 = vmatpush1.bf16.msra.mxu0 0
    %1978 = vmatprep.subr.bf16.mxu0 0
    %1979 = vmatpush1.bf16.msra.mxu0 0
    %1980 = vmatprep.mubr.bf16.mxu0 0
    %1981 = vmatmul.mubr.bf16.gmra.mrb[0].mxu0 %v1837
    %v1982 = vpop.f32.mrb[0].mxu0
    %v1983 = vadd.f32 %v1809, %v1982
    %v1984 = vpop.f32.mrb[0].mxu0
    %v1985 = vadd.f32 %v1809, %v1984
    %v1986 = vpop.f32.mrb[0].mxu0
    %v1987 = vadd.f32 %v1814, %v1986
    %v1988 = vpop.f32.mrb[0].mxu0
    %v1989 = vadd.f32 %v1814, %v1988
    %1990 = vmatprep.mubr.bf16.mxu0 0
    %1991 = vmatmul.mubr.bf16.gmra.mrb[0].mxu0 %v1840
    %v1992 = vpop.f32.mrb[0].mxu0
    %v1993 = vadd.f32 %v1819, %v1992
    %v1994 = vpop.f32.mrb[0].mxu0
    %v1995 = vadd.f32 %v1819, %v1994
    %v1996 = vpop.f32.mrb[0].mxu0
    %v1997 = vadd.f32 %v1824, %v1996
    %v1998 = vpop.f32.mrb[0].mxu0
    %v1999 = vadd.f32 %v1824, %v1998
    %2000 = vdwg.mxu0
    %2001 = vmatprep.subr.bf16.mxu0 %v1792
    %2002 = vmatpush1.bf16.msra.mxu0 %v1791
    %2003 = vmatprep.subr.bf16.mxu0 %v1800
    %2004 = vmatpush1.bf16.msra.mxu0 %v1799
    %2005 = vmatprep.subr.bf16.mxu0 0
    %2006 = vmatpush1.bf16.msra.mxu0 0
    %2007 = vmatprep.subr.bf16.mxu0 0
    %2008 = vmatpush1.bf16.msra.mxu0 0
    %2009 = vmatprep.subr.bf16.mxu0 0
    %2010 = vmatpush1.bf16.msra.mxu0 0
    %2011 = vmatprep.subr.bf16.mxu0 0
    %2012 = vmatpush1.bf16.msra.mxu0 0
    %2013 = vmatprep.subr.bf16.mxu0 0
    %2014 = vmatpush1.bf16.msra.mxu0 0
    %2015 = vmatprep.subr.bf16.mxu0 0
    %2016 = vmatpush1.bf16.msra.mxu0 0
    %2017 = vmatprep.subr.bf16.mxu0 0
    %2018 = vmatpush1.bf16.msra.mxu0 0
    %2019 = vmatprep.subr.bf16.mxu0 0
    %2020 = vmatpush1.bf16.msra.mxu0 0
    %2021 = vmatprep.subr.bf16.mxu0 0
    %2022 = vmatpush1.bf16.msra.mxu0 0
    %2023 = vmatprep.subr.bf16.mxu0 0
    %2024 = vmatpush1.bf16.msra.mxu0 0
    %2025 = vmatprep.subr.bf16.mxu0 0
    %2026 = vmatpush1.bf16.msra.mxu0 0
    %2027 = vmatprep.subr.bf16.mxu0 0
    %2028 = vmatpush1.bf16.msra.mxu0 0
    %2029 = vmatprep.subr.bf16.mxu0 0
    %2030 = vmatpush1.bf16.msra.mxu0 0
    %2031 = vmatprep.subr.bf16.mxu0 0
    %2032 = vmatpush1.bf16.msra.mxu0 0
    %2033 = vmatprep.mubr.bf16.mxu0 0
    %2034 = vmatmul.mubr.bf16.gmra.mrb[0].mxu0 %v1837
    %v2035 = vpop.f32.mrb[0].mxu0
    %v2036 = vadd.f32 %v1809, %v2035
    %v2037 = vpop.f32.mrb[0].mxu0
    %v2038 = vadd.f32 %v1809, %v2037
    %v2039 = vpop.f32.mrb[0].mxu0
    %v2040 = vadd.f32 %v1814, %v2039
    %v2041 = vpop.f32.mrb[0].mxu0
    %v2042 = vadd.f32 %v1814, %v2041
    %2043 = vmatprep.mubr.bf16.mxu0 0
    %2044 = vmatmul.mubr.bf16.gmra.mrb[0].mxu0 %v1840
    %v2045 = vpop.f32.mrb[0].mxu0
    %v2046 = vadd.f32 %v1819, %v2045
    %v2047 = vpop.f32.mrb[0].mxu0
    %v2048 = vadd.f32 %v1819, %v2047
    %v2049 = vpop.f32.mrb[0].mxu0
    %v2050 = vadd.f32 %v1824, %v2049
    %v2051 = vpop.f32.mrb[0].mxu0
    %v2052 = vadd.f32 %v1824, %v2051
    %2053 = vdwg.mxu0
    %v2054 = vmin.f32 %v1877, 20.0
    %v2055 = vmin.f32 %v1879, 20.0
    %v2056 = vmin.f32 %v1930, 20.0
    %v2057 = vmin.f32 %v1932, 20.0
    %v2058 = vmin.f32 %v1983, 20.0
    %v2059 = vmin.f32 %v1985, 20.0
    %v2060 = vmin.f32 %v2036, 20.0
    %v2061 = vmin.f32 %v2038, 20.0
    %v2062 = vmin.f32 %v1881, 20.0
    %v2063 = vmin.f32 %v1883, 20.0
    %v2064 = vmin.f32 %v1934, 20.0
    %v2065 = vmin.f32 %v1936, 20.0
    %v2066 = vmin.f32 %v1987, 20.0
    %v2067 = vmin.f32 %v1989, 20.0
    %v2068 = vmin.f32 %v2040, 20.0
    %v2069 = vmin.f32 %v2042, 20.0
    %v2070 = vmin.f32 %v1887, 20.0
    %v2071 = vmin.f32 %v1889, 20.0
    %v2072 = vmin.f32 %v1940, 20.0
    %v2073 = vmin.f32 %v1942, 20.0
    %v2074 = vmin.f32 %v1993, 20.0
    %v2075 = vmin.f32 %v1995, 20.0
    %v2076 = vmin.f32 %v2046, 20.0
    %v2077 = vmin.f32 %v2048, 20.0
    %v2078 = vmin.f32 %v1891, 20.0
    %v2079 = vmin.f32 %v1893, 20.0
    %v2080 = vmin.f32 %v1944, 20.0
    %v2081 = vmin.f32 %v1946, 20.0
    %v2082 = vmin.f32 %v1997, 20.0
    %v2083 = vmin.f32 %v1999, 20.0
    %v2084 = vmin.f32 %v2050, 20.0
    %v2085 = vmin.f32 %v2052, 20.0
    %v2086 = vmul.f32 %v2054, 1.442695
    %v2087 = vpow.pop %v2086
    %v2088 = vmul.f32 %v2055, 1.442695
    %v2089 = vpow.pop %v2088
    %v2090 = vmul.f32 %v2056, 1.442695
    %v2091 = vpow.pop %v2090
    %v2092 = vmul.f32 %v2057, 1.442695
    %v2093 = vpow.pop %v2092
    %v2094 = vmul.f32 %v2058, 1.442695
    %v2095 = vpow.pop %v2094
    %v2096 = vmul.f32 %v2059, 1.442695
    %v2097 = vpow.pop %v2096
    %v2098 = vmul.f32 %v2060, 1.442695
    %v2099 = vpow.pop %v2098
    %v2100 = vmul.f32 %v2061, 1.442695
    %v2101 = vpow.pop %v2100
    %v2102 = vmul.f32 %v2062, 1.442695
    %v2103 = vpow.pop %v2102
    %v2104 = vmul.f32 %v2063, 1.442695
    %v2105 = vpow.pop %v2104
    %v2106 = vmul.f32 %v2064, 1.442695
    %v2107 = vpow.pop %v2106
    %v2108 = vmul.f32 %v2065, 1.442695
    %v2109 = vpow.pop %v2108
    %v2110 = vmul.f32 %v2066, 1.442695
    %v2111 = vpow.pop %v2110
    %v2112 = vmul.f32 %v2067, 1.442695
    %v2113 = vpow.pop %v2112
    %v2114 = vmul.f32 %v2068, 1.442695
    %v2115 = vpow.pop %v2114
    %v2116 = vmul.f32 %v2069, 1.442695
    %v2117 = vpow.pop %v2116
    %v2118 = vmul.f32 %v2070, 1.442695
    %v2119 = vpow.pop %v2118
    %v2120 = vmul.f32 %v2071, 1.442695
    %v2121 = vpow.pop %v2120
    %v2122 = vmul.f32 %v2072, 1.442695
    %v2123 = vpow.pop %v2122
    %v2124 = vmul.f32 %v2073, 1.442695
    %v2125 = vpow.pop %v2124
    %v2126 = vmul.f32 %v2074, 1.442695
    %v2127 = vpow.pop %v2126
    %v2128 = vmul.f32 %v2075, 1.442695
    %v2129 = vpow.pop %v2128
    %v2130 = vmul.f32 %v2076, 1.442695
    %v2131 = vpow.pop %v2130
    %v2132 = vmul.f32 %v2077, 1.442695
    %v2133 = vpow.pop %v2132
    %v2134 = vmul.f32 %v2078, 1.442695
    %v2135 = vpow.pop %v2134
    %v2136 = vmul.f32 %v2079, 1.442695
    %v2137 = vpow.pop %v2136
    %v2138 = vmul.f32 %v2080, 1.442695
    %v2139 = vpow.pop %v2138
    %v2140 = vmul.f32 %v2081, 1.442695
    %v2141 = vpow.pop %v2140
    %v2142 = vmul.f32 %v2082, 1.442695
    %v2143 = vpow.pop %v2142
    %v2144 = vmul.f32 %v2083, 1.442695
    %v2145 = vpow.pop %v2144
    %v2146 = vmul.f32 %v2084, 1.442695
    %v2147 = vpow.pop %v2146
    %v2148 = vmul.f32 %v2085, 1.442695
    %v2149 = vpow.pop %v2148
    %v2150 = vadd.f32 %v2087, 2.0
    %v2151 = vadd.f32 %v2089, 2.0
    %v2152 = vadd.f32 %v2091, 2.0
    %v2153 = vadd.f32 %v2093, 2.0
    %v2154 = vadd.f32 %v2095, 2.0
    %v2155 = vadd.f32 %v2097, 2.0
    %v2156 = vadd.f32 %v2099, 2.0
    %v2157 = vadd.f32 %v2101, 2.0
    %v2158 = vadd.f32 %v2103, 2.0
    %v2159 = vadd.f32 %v2105, 2.0
    %v2160 = vadd.f32 %v2107, 2.0
    %v2161 = vadd.f32 %v2109, 2.0
    %v2162 = vadd.f32 %v2111, 2.0
    %v2163 = vadd.f32 %v2113, 2.0
    %v2164 = vadd.f32 %v2115, 2.0
    %v2165 = vadd.f32 %v2117, 2.0
    %v2166 = vadd.f32 %v2119, 2.0
    %v2167 = vadd.f32 %v2121, 2.0
    %v2168 = vadd.f32 %v2123, 2.0
    %v2169 = vadd.f32 %v2125, 2.0
    %v2170 = vadd.f32 %v2127, 2.0
    %v2171 = vadd.f32 %v2129, 2.0
    %v2172 = vadd.f32 %v2131, 2.0
    %v2173 = vadd.f32 %v2133, 2.0
    %v2174 = vadd.f32 %v2135, 2.0
    %v2175 = vadd.f32 %v2137, 2.0
    %v2176 = vadd.f32 %v2139, 2.0
    %v2177 = vadd.f32 %v2141, 2.0
    %v2178 = vadd.f32 %v2143, 2.0
    %v2179 = vadd.f32 %v2145, 2.0
    %v2180 = vadd.f32 %v2147, 2.0
    %v2181 = vadd.f32 %v2149, 2.0
    %v2182 = vmul.f32 %v2087, %v2150
    %v2183 = vmul.f32 %v2089, %v2151
    %v2184 = vmul.f32 %v2091, %v2152
    %v2185 = vmul.f32 %v2093, %v2153
    %v2186 = vmul.f32 %v2095, %v2154
    %v2187 = vmul.f32 %v2097, %v2155
    %v2188 = vmul.f32 %v2099, %v2156
    %v2189 = vmul.f32 %v2101, %v2157
    %v2190 = vmul.f32 %v2103, %v2158
    %v2191 = vmul.f32 %v2105, %v2159
    %v2192 = vmul.f32 %v2107, %v2160
    %v2193 = vmul.f32 %v2109, %v2161
    %v2194 = vmul.f32 %v2111, %v2162
    %v2195 = vmul.f32 %v2113, %v2163
    %v2196 = vmul.f32 %v2115, %v2164
    %v2197 = vmul.f32 %v2117, %v2165
    %v2198 = vmul.f32 %v2119, %v2166
    %v2199 = vmul.f32 %v2121, %v2167
    %v2200 = vmul.f32 %v2123, %v2168
    %v2201 = vmul.f32 %v2125, %v2169
    %v2202 = vmul.f32 %v2127, %v2170
    %v2203 = vmul.f32 %v2129, %v2171
    %v2204 = vmul.f32 %v2131, %v2172
    %v2205 = vmul.f32 %v2133, %v2173
    %v2206 = vmul.f32 %v2135, %v2174
    %v2207 = vmul.f32 %v2137, %v2175
    %v2208 = vmul.f32 %v2139, %v2176
    %v2209 = vmul.f32 %v2141, %v2177
    %v2210 = vmul.f32 %v2143, %v2178
    %v2211 = vmul.f32 %v2145, %v2179
    %v2212 = vmul.f32 %v2147, %v2180
    %v2213 = vmul.f32 %v2149, %v2181
    %v2214 = vmul.f32 %v1877, %v2182
    %v2215 = vmul.f32 %v1879, %v2183
    %v2216 = vmul.f32 %v1930, %v2184
    %v2217 = vmul.f32 %v1932, %v2185
    %v2218 = vmul.f32 %v1983, %v2186
    %v2219 = vmul.f32 %v1985, %v2187
    %v2220 = vmul.f32 %v2036, %v2188
    %v2221 = vmul.f32 %v2038, %v2189
    %v2222 = vmul.f32 %v1881, %v2190
    %v2223 = vmul.f32 %v1883, %v2191
    %v2224 = vmul.f32 %v1934, %v2192
    %v2225 = vmul.f32 %v1936, %v2193
    %v2226 = vmul.f32 %v1987, %v2194
    %v2227 = vmul.f32 %v1989, %v2195
    %v2228 = vmul.f32 %v2040, %v2196
    %v2229 = vmul.f32 %v2042, %v2197
    %v2230 = vmul.f32 %v1887, %v2198
    %v2231 = vmul.f32 %v1889, %v2199
    %v2232 = vmul.f32 %v1940, %v2200
    %v2233 = vmul.f32 %v1942, %v2201
    %v2234 = vmul.f32 %v1993, %v2202
    %v2235 = vmul.f32 %v1995, %v2203
    %v2236 = vmul.f32 %v2046, %v2204
    %v2237 = vmul.f32 %v2048, %v2205
    %v2238 = vmul.f32 %v1891, %v2206
    %v2239 = vmul.f32 %v1893, %v2207
    %v2240 = vmul.f32 %v1944, %v2208
    %v2241 = vmul.f32 %v1946, %v2209
    %v2242 = vmul.f32 %v1997, %v2210
    %v2243 = vmul.f32 %v1999, %v2211
    %v2244 = vmul.f32 %v2050, %v2212
    %v2245 = vmul.f32 %v2052, %v2213
    %v2246 = vadd.f32 %v2182, 2.0
    %v2247 = vadd.f32 %v2183, 2.0
    %v2248 = vadd.f32 %v2184, 2.0
    %v2249 = vadd.f32 %v2185, 2.0
    %v2250 = vadd.f32 %v2186, 2.0
    %v2251 = vadd.f32 %v2187, 2.0
    %v2252 = vadd.f32 %v2188, 2.0
    %v2253 = vadd.f32 %v2189, 2.0
    %v2254 = vadd.f32 %v2190, 2.0
    %v2255 = vadd.f32 %v2191, 2.0
    %v2256 = vadd.f32 %v2192, 2.0
    %v2257 = vadd.f32 %v2193, 2.0
    %v2258 = vadd.f32 %v2194, 2.0
    %v2259 = vadd.f32 %v2195, 2.0
    %v2260 = vadd.f32 %v2196, 2.0
    %v2261 = vadd.f32 %v2197, 2.0
    %v2262 = vadd.f32 %v2198, 2.0
    %v2263 = vadd.f32 %v2199, 2.0
    %v2264 = vadd.f32 %v2200, 2.0
    %v2265 = vadd.f32 %v2201, 2.0
    %v2266 = vadd.f32 %v2202, 2.0
    %v2267 = vadd.f32 %v2203, 2.0
    %v2268 = vadd.f32 %v2204, 2.0
    %v2269 = vadd.f32 %v2205, 2.0
    %v2270 = vadd.f32 %v2206, 2.0
    %v2271 = vadd.f32 %v2207, 2.0
    %v2272 = vadd.f32 %v2208, 2.0
    %v2273 = vadd.f32 %v2209, 2.0
    %v2274 = vadd.f32 %v2210, 2.0
    %v2275 = vadd.f32 %v2211, 2.0
    %v2276 = vadd.f32 %v2212, 2.0
    %v2277 = vadd.f32 %v2213, 2.0
    %v2278 = vrcp.pop %v2246
    %v2279 = vrcp.pop %v2247
    %v2280 = vrcp.pop %v2248
    %v2281 = vrcp.pop %v2249
    %v2282 = vrcp.pop %v2250
    %v2283 = vrcp.pop %v2251
    %v2284 = vrcp.pop %v2252
    %v2285 = vrcp.pop %v2253
    %v2286 = vrcp.pop %v2254
    %v2287 = vrcp.pop %v2255
    %v2288 = vrcp.pop %v2256
    %v2289 = vrcp.pop %v2257
    %v2290 = vrcp.pop %v2258
    %v2291 = vrcp.pop %v2259
    %v2292 = vrcp.pop %v2260
    %v2293 = vrcp.pop %v2261
    %v2294 = vrcp.pop %v2262
    %v2295 = vrcp.pop %v2263
    %v2296 = vrcp.pop %v2264
    %v2297 = vrcp.pop %v2265
    %v2298 = vrcp.pop %v2266
    %v2299 = vrcp.pop %v2267
    %v2300 = vrcp.pop %v2268
    %v2301 = vrcp.pop %v2269
    %v2302 = vrcp.pop %v2270
    %v2303 = vrcp.pop %v2271
    %v2304 = vrcp.pop %v2272
    %v2305 = vrcp.pop %v2273
    %v2306 = vrcp.pop %v2274
    %v2307 = vrcp.pop %v2275
    %v2308 = vrcp.pop %v2276
    %v2309 = vrcp.pop %v2277
    %v2310 = vmul.f32 %v2214, %v2278
    %v2311 = vmul.f32 %v2215, %v2279
    %v2312 = vmul.f32 %v2216, %v2280
    %v2313 = vmul.f32 %v2217, %v2281
    %v2314 = vmul.f32 %v2218, %v2282
    %v2315 = vmul.f32 %v2219, %v2283
    %v2316 = vmul.f32 %v2220, %v2284
    %v2317 = vmul.f32 %v2221, %v2285
    %v2318 = vmul.f32 %v2222, %v2286
    %v2319 = vmul.f32 %v2223, %v2287
    %v2320 = vmul.f32 %v2224, %v2288
    %v2321 = vmul.f32 %v2225, %v2289
    %v2322 = vmul.f32 %v2226, %v2290
    %v2323 = vmul.f32 %v2227, %v2291
    %v2324 = vmul.f32 %v2228, %v2292
    %v2325 = vmul.f32 %v2229, %v2293
    %v2326 = vmul.f32 %v2230, %v2294
    %v2327 = vmul.f32 %v2231, %v2295
    %v2328 = vmul.f32 %v2232, %v2296
    %v2329 = vmul.f32 %v2233, %v2297
    %v2330 = vmul.f32 %v2234, %v2298
    %v2331 = vmul.f32 %v2235, %v2299
    %v2332 = vmul.f32 %v2236, %v2300
    %v2333 = vmul.f32 %v2237, %v2301
    %v2334 = vmul.f32 %v2238, %v2302
    %v2335 = vmul.f32 %v2239, %v2303
    %v2336 = vmul.f32 %v2240, %v2304
    %v2337 = vmul.f32 %v2241, %v2305
    %v2338 = vmul.f32 %v2242, %v2306
    %v2339 = vmul.f32 %v2243, %v2307
    %v2340 = vmul.f32 %v2244, %v2308
    %v2341 = vmul.f32 %v2245, %v2309
    %s2342 = scalar_lea.vmem %s5, 16
    %v2343 = vld [vmem:[%s2342] sm:$0xf]
    %v2344 = vld [vmem:[%s2342 + $0x4] sm:$0xf]
    %v2345 = vld [vmem:[%s2342 + $0x8] sm:$0xf]
    %v2346 = vld [vmem:[%s2342 + $0xc] sm:$0xf]
    %v2347 = vpack.c.bf16 %v2318, %v2310
    %v2348 = vpack.c.bf16 %v2319, %v2311
    %v2349 = vpack.c.bf16 %v2320, %v2312
    %v2350 = vpack.c.bf16 %v2321, %v2313
    %v2351 = vpack.c.bf16 %v2322, %v2314
    %v2352 = vpack.c.bf16 %v2323, %v2315
    %v2353 = vpack.c.bf16 %v2324, %v2316
    %v2354 = vpack.c.bf16 %v2325, %v2317
    %v2355 = vpack.c.bf16 %v2334, %v2326
    %v2356 = vpack.c.bf16 %v2335, %v2327
    %v2357 = vpack.c.bf16 %v2336, %v2328
    %v2358 = vpack.c.bf16 %v2337, %v2329
    %v2359 = vpack.c.bf16 %v2338, %v2330
    %v2360 = vpack.c.bf16 %v2339, %v2331
    %v2361 = vpack.c.bf16 %v2340, %v2332
    %v2362 = vpack.c.bf16 %v2341, %v2333
    %s2363 = scalar_lea.vmem %s6, 32
    %v2364 = vld [vmem:[%s2363] sm:$0xff]
    %v2365 = vld [vmem:[%s2363 + $0x8] sm:$0xff]
    %v2366 = vld [vmem:[%s2363 + $0x10] sm:$0xff]
    %v2367 = vld [vmem:[%s2363 + $0x18] sm:$0xff]
    %2369 = vset.pattern.permute.xlu0 0
    %2370 = vperm.xlu0 %2369, %v2364
    %v2371 = vpop.permute.xlu0 %2370
    %2374 = vset.pattern.permute.xlu0 0
    %2375 = vperm.xlu0 %2374, %v2365
    %v2376 = vpop.permute.xlu0 %2375
    %2379 = vset.pattern.permute.xlu0 0
    %2380 = vperm.xlu0 %2379, %v2366
    %v2381 = vpop.permute.xlu0 %2380
    %2384 = vset.pattern.permute.xlu0 0
    %2385 = vperm.xlu0 %2384, %v2367
    %v2386 = vpop.permute.xlu0 %2385
    %v2392 = vunpack.c.l.b16 %v2343
    %v2393 = vunpack.c.l.b16 %v2344
    %v2394 = vunpack.c.l.b16 %v2345
    %v2395 = vunpack.c.l.b16 %v2346
    %v2396 = vpack.c.b16 %v2393, %v2392
    %v2397 = vpack.c.b16 %v2395, %v2394
    %v2399 = vsel %vm681, %v2396, 0
    %v2402 = vsel %vm681, %v2397, 0
    %2404 = vmatprep.subr.bf16.mxu0 %v2348
    %2405 = vmatpush1.bf16.msra.mxu0 %v2347
    %2406 = vmatprep.subr.bf16.mxu0 %v2356
    %2407 = vmatpush1.bf16.msra.mxu0 %v2355
    %2408 = vmatprep.subr.bf16.mxu0 0
    %2409 = vmatpush1.bf16.msra.mxu0 0
    %2410 = vmatprep.subr.bf16.mxu0 0
    %2411 = vmatpush1.bf16.msra.mxu0 0
    %2412 = vmatprep.subr.bf16.mxu0 0
    %2413 = vmatpush1.bf16.msra.mxu0 0
    %2414 = vmatprep.subr.bf16.mxu0 0
    %2415 = vmatpush1.bf16.msra.mxu0 0
    %2416 = vmatprep.subr.bf16.mxu0 0
    %2417 = vmatpush1.bf16.msra.mxu0 0
    %2418 = vmatprep.subr.bf16.mxu0 0
    %2419 = vmatpush1.bf16.msra.mxu0 0
    %2420 = vmatprep.subr.bf16.mxu0 0
    %2421 = vmatpush1.bf16.msra.mxu0 0
    %2422 = vmatprep.subr.bf16.mxu0 0
    %2423 = vmatpush1.bf16.msra.mxu0 0
    %2424 = vmatprep.subr.bf16.mxu0 0
    %2425 = vmatpush1.bf16.msra.mxu0 0
    %2426 = vmatprep.subr.bf16.mxu0 0
    %2427 = vmatpush1.bf16.msra.mxu0 0
    %2428 = vmatprep.subr.bf16.mxu0 0
    %2429 = vmatpush1.bf16.msra.mxu0 0
    %2430 = vmatprep.subr.bf16.mxu0 0
    %2431 = vmatpush1.bf16.msra.mxu0 0
    %2432 = vmatprep.subr.bf16.mxu0 0
    %2433 = vmatpush1.bf16.msra.mxu0 0
    %2434 = vmatprep.subr.bf16.mxu0 0
    %2435 = vmatpush1.bf16.msra.mxu0 0
    %2436 = vmatprep.mubr.bf16.mxu0 0
    %2437 = vmatmul.mubr.bf16.gmra.mrb[0].mxu0 %v2399
    %v2438 = vpop.f32.mrb[0].mxu0
    %v2439 = vadd.f32 %v2371, %v2438
    %v2440 = vpop.f32.mrb[0].mxu0
    %v2441 = vadd.f32 %v2371, %v2440
    %v2442 = vpop.f32.mrb[0].mxu0
    %v2443 = vadd.f32 %v2376, %v2442
    %v2444 = vpop.f32.mrb[0].mxu0
    %v2445 = vadd.f32 %v2376, %v2444
    %2446 = vmatprep.mubr.bf16.mxu0 0
    %2447 = vmatmul.mubr.bf16.gmra.mrb[0].mxu0 %v2402
    %v2448 = vpop.f32.mrb[0].mxu0
    %v2449 = vadd.f32 %v2381, %v2448
    %v2450 = vpop.f32.mrb[0].mxu0
    %v2451 = vadd.f32 %v2381, %v2450
    %v2452 = vpop.f32.mrb[0].mxu0
    %v2453 = vadd.f32 %v2386, %v2452
    %v2454 = vpop.f32.mrb[0].mxu0
    %v2455 = vadd.f32 %v2386, %v2454
    %2456 = vdwg.mxu0
    %2457 = vmatprep.subr.bf16.mxu0 %v2350
    %2458 = vmatpush1.bf16.msra.mxu0 %v2349
    %2459 = vmatprep.subr.bf16.mxu0 %v2358
    %2460 = vmatpush1.bf16.msra.mxu0 %v2357
    %2461 = vmatprep.subr.bf16.mxu0 0
    %2462 = vmatpush1.bf16.msra.mxu0 0
    %2463 = vmatprep.subr.bf16.mxu0 0
    %2464 = vmatpush1.bf16.msra.mxu0 0
    %2465 = vmatprep.subr.bf16.mxu0 0
    %2466 = vmatpush1.bf16.msra.mxu0 0
    %2467 = vmatprep.subr.bf16.mxu0 0
    %2468 = vmatpush1.bf16.msra.mxu0 0
    %2469 = vmatprep.subr.bf16.mxu0 0
    %2470 = vmatpush1.bf16.msra.mxu0 0
    %2471 = vmatprep.subr.bf16.mxu0 0
    %2472 = vmatpush1.bf16.msra.mxu0 0
    %2473 = vmatprep.subr.bf16.mxu0 0
    %2474 = vmatpush1.bf16.msra.mxu0 0
    %2475 = vmatprep.subr.bf16.mxu0 0
    %2476 = vmatpush1.bf16.msra.mxu0 0
    %2477 = vmatprep.subr.bf16.mxu0 0
    %2478 = vmatpush1.bf16.msra.mxu0 0
    %2479 = vmatprep.subr.bf16.mxu0 0
    %2480 = vmatpush1.bf16.msra.mxu0 0
    %2481 = vmatprep.subr.bf16.mxu0 0
    %2482 = vmatpush1.bf16.msra.mxu0 0
    %2483 = vmatprep.subr.bf16.mxu0 0
    %2484 = vmatpush1.bf16.msra.mxu0 0
    %2485 = vmatprep.subr.bf16.mxu0 0
    %2486 = vmatpush1.bf16.msra.mxu0 0
    %2487 = vmatprep.subr.bf16.mxu0 0
    %2488 = vmatpush1.bf16.msra.mxu0 0
    %2489 = vmatprep.mubr.bf16.mxu0 0
    %2490 = vmatmul.mubr.bf16.gmra.mrb[0].mxu0 %v2399
    %v2491 = vpop.f32.mrb[0].mxu0
    %v2492 = vadd.f32 %v2371, %v2491
    %v2493 = vpop.f32.mrb[0].mxu0
    %v2494 = vadd.f32 %v2371, %v2493
    %v2495 = vpop.f32.mrb[0].mxu0
    %v2496 = vadd.f32 %v2376, %v2495
    %v2497 = vpop.f32.mrb[0].mxu0
    %v2498 = vadd.f32 %v2376, %v2497
    %2499 = vmatprep.mubr.bf16.mxu0 0
    %2500 = vmatmul.mubr.bf16.gmra.mrb[0].mxu0 %v2402
    %v2501 = vpop.f32.mrb[0].mxu0
    %v2502 = vadd.f32 %v2381, %v2501
    %v2503 = vpop.f32.mrb[0].mxu0
    %v2504 = vadd.f32 %v2381, %v2503
    %v2505 = vpop.f32.mrb[0].mxu0
    %v2506 = vadd.f32 %v2386, %v2505
    %v2507 = vpop.f32.mrb[0].mxu0
    %v2508 = vadd.f32 %v2386, %v2507
    %2509 = vdwg.mxu0
    %2510 = vmatprep.subr.bf16.mxu0 %v2352
    %2511 = vmatpush1.bf16.msra.mxu0 %v2351
    %2512 = vmatprep.subr.bf16.mxu0 %v2360
    %2513 = vmatpush1.bf16.msra.mxu0 %v2359
    %2514 = vmatprep.subr.bf16.mxu0 0
    %2515 = vmatpush1.bf16.msra.mxu0 0
    %2516 = vmatprep.subr.bf16.mxu0 0
    %2517 = vmatpush1.bf16.msra.mxu0 0
    %2518 = vmatprep.subr.bf16.mxu0 0
    %2519 = vmatpush1.bf16.msra.mxu0 0
    %2520 = vmatprep.subr.bf16.mxu0 0
    %2521 = vmatpush1.bf16.msra.mxu0 0
    %2522 = vmatprep.subr.bf16.mxu0 0
    %2523 = vmatpush1.bf16.msra.mxu0 0
    %2524 = vmatprep.subr.bf16.mxu0 0
    %2525 = vmatpush1.bf16.msra.mxu0 0
    %2526 = vmatprep.subr.bf16.mxu0 0
    %2527 = vmatpush1.bf16.msra.mxu0 0
    %2528 = vmatprep.subr.bf16.mxu0 0
    %2529 = vmatpush1.bf16.msra.mxu0 0
    %2530 = vmatprep.subr.bf16.mxu0 0
    %2531 = vmatpush1.bf16.msra.mxu0 0
    %2532 = vmatprep.subr.bf16.mxu0 0
    %2533 = vmatpush1.bf16.msra.mxu0 0
    %2534 = vmatprep.subr.bf16.mxu0 0
    %2535 = vmatpush1.bf16.msra.mxu0 0
    %2536 = vmatprep.subr.bf16.mxu0 0
    %2537 = vmatpush1.bf16.msra.mxu0 0
    %2538 = vmatprep.subr.bf16.mxu0 0
    %2539 = vmatpush1.bf16.msra.mxu0 0
    %2540 = vmatprep.subr.bf16.mxu0 0
    %2541 = vmatpush1.bf16.msra.mxu0 0
    %2542 = vmatprep.mubr.bf16.mxu0 0
    %2543 = vmatmul.mubr.bf16.gmra.mrb[0].mxu0 %v2399
    %v2544 = vpop.f32.mrb[0].mxu0
    %v2545 = vadd.f32 %v2371, %v2544
    %v2546 = vpop.f32.mrb[0].mxu0
    %v2547 = vadd.f32 %v2371, %v2546
    %v2548 = vpop.f32.mrb[0].mxu0
    %v2549 = vadd.f32 %v2376, %v2548
    %v2550 = vpop.f32.mrb[0].mxu0
    %v2551 = vadd.f32 %v2376, %v2550
    %2552 = vmatprep.mubr.bf16.mxu0 0
    %2553 = vmatmul.mubr.bf16.gmra.mrb[0].mxu0 %v2402
    %v2554 = vpop.f32.mrb[0].mxu0
    %v2555 = vadd.f32 %v2381, %v2554
    %v2556 = vpop.f32.mrb[0].mxu0
    %v2557 = vadd.f32 %v2381, %v2556
    %v2558 = vpop.f32.mrb[0].mxu0
    %v2559 = vadd.f32 %v2386, %v2558
    %v2560 = vpop.f32.mrb[0].mxu0
    %v2561 = vadd.f32 %v2386, %v2560
    %2562 = vdwg.mxu0
    %2563 = vmatprep.subr.bf16.mxu0 %v2354
    %2564 = vmatpush1.bf16.msra.mxu0 %v2353
    %2565 = vmatprep.subr.bf16.mxu0 %v2362
    %2566 = vmatpush1.bf16.msra.mxu0 %v2361
    %2567 = vmatprep.subr.bf16.mxu0 0
    %2568 = vmatpush1.bf16.msra.mxu0 0
    %2569 = vmatprep.subr.bf16.mxu0 0
    %2570 = vmatpush1.bf16.msra.mxu0 0
    %2571 = vmatprep.subr.bf16.mxu0 0
    %2572 = vmatpush1.bf16.msra.mxu0 0
    %2573 = vmatprep.subr.bf16.mxu0 0
    %2574 = vmatpush1.bf16.msra.mxu0 0
    %2575 = vmatprep.subr.bf16.mxu0 0
    %2576 = vmatpush1.bf16.msra.mxu0 0
    %2577 = vmatprep.subr.bf16.mxu0 0
    %2578 = vmatpush1.bf16.msra.mxu0 0
    %2579 = vmatprep.subr.bf16.mxu0 0
    %2580 = vmatpush1.bf16.msra.mxu0 0
    %2581 = vmatprep.subr.bf16.mxu0 0
    %2582 = vmatpush1.bf16.msra.mxu0 0
    %2583 = vmatprep.subr.bf16.mxu0 0
    %2584 = vmatpush1.bf16.msra.mxu0 0
    %2585 = vmatprep.subr.bf16.mxu0 0
    %2586 = vmatpush1.bf16.msra.mxu0 0
    %2587 = vmatprep.subr.bf16.mxu0 0
    %2588 = vmatpush1.bf16.msra.mxu0 0
    %2589 = vmatprep.subr.bf16.mxu0 0
    %2590 = vmatpush1.bf16.msra.mxu0 0
    %2591 = vmatprep.subr.bf16.mxu0 0
    %2592 = vmatpush1.bf16.msra.mxu0 0
    %2593 = vmatprep.subr.bf16.mxu0 0
    %2594 = vmatpush1.bf16.msra.mxu0 0
    %2595 = vmatprep.mubr.bf16.mxu0 0
    %2596 = vmatmul.mubr.bf16.gmra.mrb[0].mxu0 %v2399
    %v2597 = vpop.f32.mrb[0].mxu0
    %v2598 = vadd.f32 %v2371, %v2597
    %v2599 = vpop.f32.mrb[0].mxu0
    %v2600 = vadd.f32 %v2371, %v2599
    %v2601 = vpop.f32.mrb[0].mxu0
    %v2602 = vadd.f32 %v2376, %v2601
    %v2603 = vpop.f32.mrb[0].mxu0
    %v2604 = vadd.f32 %v2376, %v2603
    %2605 = vmatprep.mubr.bf16.mxu0 0
    %2606 = vmatmul.mubr.bf16.gmra.mrb[0].mxu0 %v2402
    %v2607 = vpop.f32.mrb[0].mxu0
    %v2608 = vadd.f32 %v2381, %v2607
    %v2609 = vpop.f32.mrb[0].mxu0
    %v2610 = vadd.f32 %v2381, %v2609
    %v2611 = vpop.f32.mrb[0].mxu0
    %v2612 = vadd.f32 %v2386, %v2611
    %v2613 = vpop.f32.mrb[0].mxu0
    %v2614 = vadd.f32 %v2386, %v2613
    %2615 = vdwg.mxu0
    %v2616 = vadd.f32 %v2439, %v1460
    %v2617 = vadd.f32 %v2441, %v1461
    %v2618 = vadd.f32 %v2492, %v1462
    %v2619 = vadd.f32 %v2494, %v1463
    %v2620 = vadd.f32 %v2545, %v1464
    %v2621 = vadd.f32 %v2547, %v1465
    %v2622 = vadd.f32 %v2598, %v1466
    %v2623 = vadd.f32 %v2600, %v1467
    %v2624 = vadd.f32 %v2443, %v1468
    %v2625 = vadd.f32 %v2445, %v1469
    %v2626 = vadd.f32 %v2496, %v1470
    %v2627 = vadd.f32 %v2498, %v1471
    %v2628 = vadd.f32 %v2549, %v1472
    %v2629 = vadd.f32 %v2551, %v1473
    %v2630 = vadd.f32 %v2602, %v1474
    %v2631 = vadd.f32 %v2604, %v1475
    %v2632 = vadd.f32 %v2449, %v1476
    %v2633 = vadd.f32 %v2451, %v1477
    %v2634 = vadd.f32 %v2502, %v1478
    %v2635 = vadd.f32 %v2504, %v1479
    %v2636 = vadd.f32 %v2555, %v1480
    %v2637 = vadd.f32 %v2557, %v1481
    %v2638 = vadd.f32 %v2608, %v1482
    %v2639 = vadd.f32 %v2610, %v1483
    %v2640 = vadd.f32 %v2453, %v1484
    %v2641 = vadd.f32 %v2455, %v1485
    %v2642 = vadd.f32 %v2506, %v1486
    %v2643 = vadd.f32 %v2508, %v1487
    %v2644 = vadd.f32 %v2559, %v1488
    %v2645 = vadd.f32 %v2561, %v1489
    %v2646 = vadd.f32 %v2612, %v1490
    %v2647 = vadd.f32 %v2614, %v1491
    %v2648 = vld [vmem:[%s7] sm:$0xf]
    %v2649 = vpack.c.bf16 %v2624, %v2616
    %v2650 = vpack.c.bf16 %v2625, %v2617
    %v2651 = vpack.c.bf16 %v2626, %v2618
    %v2652 = vpack.c.bf16 %v2627, %v2619
    %v2653 = vpack.c.bf16 %v2628, %v2620
    %v2654 = vpack.c.bf16 %v2629, %v2621
    %v2655 = vpack.c.bf16 %v2630, %v2622
    %v2656 = vpack.c.bf16 %v2631, %v2623
    %v2657 = vpack.c.bf16 %v2640, %v2632
    %v2658 = vpack.c.bf16 %v2641, %v2633
    %v2659 = vpack.c.bf16 %v2642, %v2634
    %v2660 = vpack.c.bf16 %v2643, %v2635
    %v2661 = vpack.c.bf16 %v2644, %v2636
    %v2662 = vpack.c.bf16 %v2645, %v2637
    %v2663 = vpack.c.bf16 %v2646, %v2638
    %v2664 = vpack.c.bf16 %v2647, %v2639
    %v2665 = vld [vmem:[%s8] sm:$0xff]
    %2667 = vset.pattern.permute.xlu0 0
    %2668 = vperm.xlu0 %2667, %v2665
    %v2669 = vpop.permute.xlu0 %2668
    %v2672 = vsel %vm681, %v2648, 0
    %2674 = vmatprep.subr.bf16.mxu0 %v2650
    %2675 = vmatpush1.bf16.msra.mxu0 %v2649
    %2676 = vmatprep.subr.bf16.mxu0 %v2658
    %2677 = vmatpush1.bf16.msra.mxu0 %v2657
    %2678 = vmatprep.subr.bf16.mxu0 0
    %2679 = vmatpush1.bf16.msra.mxu0 0
    %2680 = vmatprep.subr.bf16.mxu0 0
    %2681 = vmatpush1.bf16.msra.mxu0 0
    %2682 = vmatprep.subr.bf16.mxu0 0
    %2683 = vmatpush1.bf16.msra.mxu0 0
    %2684 = vmatprep.subr.bf16.mxu0 0
    %2685 = vmatpush1.bf16.msra.mxu0 0
    %2686 = vmatprep.subr.bf16.mxu0 0
    %2687 = vmatpush1.bf16.msra.mxu0 0
    %2688 = vmatprep.subr.bf16.mxu0 0
    %2689 = vmatpush1.bf16.msra.mxu0 0
    %2690 = vmatprep.subr.bf16.mxu0 0
    %2691 = vmatpush1.bf16.msra.mxu0 0
    %2692 = vmatprep.subr.bf16.mxu0 0
    %2693 = vmatpush1.bf16.msra.mxu0 0
    %2694 = vmatprep.subr.bf16.mxu0 0
    %2695 = vmatpush1.bf16.msra.mxu0 0
    %2696 = vmatprep.subr.bf16.mxu0 0
    %2697 = vmatpush1.bf16.msra.mxu0 0
    %2698 = vmatprep.subr.bf16.mxu0 0
    %2699 = vmatpush1.bf16.msra.mxu0 0
    %2700 = vmatprep.subr.bf16.mxu0 0
    %2701 = vmatpush1.bf16.msra.mxu0 0
    %2702 = vmatprep.subr.bf16.mxu0 0
    %2703 = vmatpush1.bf16.msra.mxu0 0
    %2704 = vmatprep.subr.bf16.mxu0 0
    %2705 = vmatpush1.bf16.msra.mxu0 0
    %2706 = vmatprep.mubr.bf16.mxu0 0
    %2707 = vmatmul.mubr.bf16.gmra.mrb[0].mxu0 %v2672
    %v2708 = vpop.f32.mrb[0].mxu0
    %v2709 = vadd.f32 %v2669, %v2708
    %v2710 = vpop.f32.mrb[0].mxu0
    %v2711 = vadd.f32 %v2669, %v2710
    %v2712 = vpop.f32.mrb[0].mxu0
    %v2713 = vpop.f32.mrb[0].mxu0
    %2714 = vdwg.mxu0
    %2715 = vmatprep.subr.bf16.mxu0 %v2652
    %2716 = vmatpush1.bf16.msra.mxu0 %v2651
    %2717 = vmatprep.subr.bf16.mxu0 %v2660
    %2718 = vmatpush1.bf16.msra.mxu0 %v2659
    %2719 = vmatprep.subr.bf16.mxu0 0
    %2720 = vmatpush1.bf16.msra.mxu0 0
    %2721 = vmatprep.subr.bf16.mxu0 0
    %2722 = vmatpush1.bf16.msra.mxu0 0
    %2723 = vmatprep.subr.bf16.mxu0 0
    %2724 = vmatpush1.bf16.msra.mxu0 0
    %2725 = vmatprep.subr.bf16.mxu0 0
    %2726 = vmatpush1.bf16.msra.mxu0 0
    %2727 = vmatprep.subr.bf16.mxu0 0
    %2728 = vmatpush1.bf16.msra.mxu0 0
    %2729 = vmatprep.subr.bf16.mxu0 0
    %2730 = vmatpush1.bf16.msra.mxu0 0
    %2731 = vmatprep.subr.bf16.mxu0 0
    %2732 = vmatpush1.bf16.msra.mxu0 0
    %2733 = vmatprep.subr.bf16.mxu0 0
    %2734 = vmatpush1.bf16.msra.mxu0 0
    %2735 = vmatprep.subr.bf16.mxu0 0
    %2736 = vmatpush1.bf16.msra.mxu0 0
    %2737 = vmatprep.subr.bf16.mxu0 0
    %2738 = vmatpush1.bf16.msra.mxu0 0
    %2739 = vmatprep.subr.bf16.mxu0 0
    %2740 = vmatpush1.bf16.msra.mxu0 0
    %2741 = vmatprep.subr.bf16.mxu0 0
    %2742 = vmatpush1.bf16.msra.mxu0 0
    %2743 = vmatprep.subr.bf16.mxu0 0
    %2744 = vmatpush1.bf16.msra.mxu0 0
    %2745 = vmatprep.subr.bf16.mxu0 0
    %2746 = vmatpush1.bf16.msra.mxu0 0
    %2747 = vmatprep.mubr.bf16.mxu0 0
    %2748 = vmatmul.mubr.bf16.gmra.mrb[0].mxu0 %v2672
    %v2749 = vpop.f32.mrb[0].mxu0
    %v2750 = vadd.f32 %v2669, %v2749
    %v2751 = vpop.f32.mrb[0].mxu0
    %v2752 = vadd.f32 %v2669, %v2751
    %v2753 = vpop.f32.mrb[0].mxu0
    %v2754 = vpop.f32.mrb[0].mxu0
    %2755 = vdwg.mxu0
    %2756 = vmatprep.subr.bf16.mxu0 %v2654
    %2757 = vmatpush1.bf16.msra.mxu0 %v2653
    %2758 = vmatprep.subr.bf16.mxu0 %v2662
    %2759 = vmatpush1.bf16.msra.mxu0 %v2661
    %2760 = vmatprep.subr.bf16.mxu0 0
    %2761 = vmatpush1.bf16.msra.mxu0 0
    %2762 = vmatprep.subr.bf16.mxu0 0
    %2763 = vmatpush1.bf16.msra.mxu0 0
    %2764 = vmatprep.subr.bf16.mxu0 0
    %2765 = vmatpush1.bf16.msra.mxu0 0
    %2766 = vmatprep.subr.bf16.mxu0 0
    %2767 = vmatpush1.bf16.msra.mxu0 0
    %2768 = vmatprep.subr.bf16.mxu0 0
    %2769 = vmatpush1.bf16.msra.mxu0 0
    %2770 = vmatprep.subr.bf16.mxu0 0
    %2771 = vmatpush1.bf16.msra.mxu0 0
    %2772 = vmatprep.subr.bf16.mxu0 0
    %2773 = vmatpush1.bf16.msra.mxu0 0
    %2774 = vmatprep.subr.bf16.mxu0 0
    %2775 = vmatpush1.bf16.msra.mxu0 0
    %2776 = vmatprep.subr.bf16.mxu0 0
    %2777 = vmatpush1.bf16.msra.mxu0 0
    %2778 = vmatprep.subr.bf16.mxu0 0
    %2779 = vmatpush1.bf16.msra.mxu0 0
    %2780 = vmatprep.subr.bf16.mxu0 0
    %2781 = vmatpush1.bf16.msra.mxu0 0
    %2782 = vmatprep.subr.bf16.mxu0 0
    %2783 = vmatpush1.bf16.msra.mxu0 0
    %2784 = vmatprep.subr.bf16.mxu0 0
    %2785 = vmatpush1.bf16.msra.mxu0 0
    %2786 = vmatprep.subr.bf16.mxu0 0
    %2787 = vmatpush1.bf16.msra.mxu0 0
    %2788 = vmatprep.mubr.bf16.mxu0 0
    %2789 = vmatmul.mubr.bf16.gmra.mrb[0].mxu0 %v2672
    %v2790 = vpop.f32.mrb[0].mxu0
    %v2791 = vadd.f32 %v2669, %v2790
    %v2792 = vpop.f32.mrb[0].mxu0
    %v2793 = vadd.f32 %v2669, %v2792
    %v2794 = vpop.f32.mrb[0].mxu0
    %v2795 = vpop.f32.mrb[0].mxu0
    %2796 = vdwg.mxu0
    %2797 = vmatprep.subr.bf16.mxu0 %v2656
    %2798 = vmatpush1.bf16.msra.mxu0 %v2655
    %2799 = vmatprep.subr.bf16.mxu0 %v2664
    %2800 = vmatpush1.bf16.msra.mxu0 %v2663
    %2801 = vmatprep.subr.bf16.mxu0 0
    %2802 = vmatpush1.bf16.msra.mxu0 0
    %2803 = vmatprep.subr.bf16.mxu0 0
    %2804 = vmatpush1.bf16.msra.mxu0 0
    %2805 = vmatprep.subr.bf16.mxu0 0
    %2806 = vmatpush1.bf16.msra.mxu0 0
    %2807 = vmatprep.subr.bf16.mxu0 0
    %2808 = vmatpush1.bf16.msra.mxu0 0
    %2809 = vmatprep.subr.bf16.mxu0 0
    %2810 = vmatpush1.bf16.msra.mxu0 0
    %2811 = vmatprep.subr.bf16.mxu0 0
    %2812 = vmatpush1.bf16.msra.mxu0 0
    %2813 = vmatprep.subr.bf16.mxu0 0
    %2814 = vmatpush1.bf16.msra.mxu0 0
    %2815 = vmatprep.subr.bf16.mxu0 0
    %2816 = vmatpush1.bf16.msra.mxu0 0
    %2817 = vmatprep.subr.bf16.mxu0 0
    %2818 = vmatpush1.bf16.msra.mxu0 0
    %2819 = vmatprep.subr.bf16.mxu0 0
    %2820 = vmatpush1.bf16.msra.mxu0 0
    %2821 = vmatprep.subr.bf16.mxu0 0
    %2822 = vmatpush1.bf16.msra.mxu0 0
    %2823 = vmatprep.subr.bf16.mxu0 0
    %2824 = vmatpush1.bf16.msra.mxu0 0
    %2825 = vmatprep.subr.bf16.mxu0 0
    %2826 = vmatpush1.bf16.msra.mxu0 0
    %2827 = vmatprep.subr.bf16.mxu0 0
    %2828 = vmatpush1.bf16.msra.mxu0 0
    %2829 = vmatprep.mubr.bf16.mxu0 0
    %2830 = vmatmul.mubr.bf16.gmra.mrb[0].mxu0 %v2672
    %v2831 = vpop.f32.mrb[0].mxu0
    %v2832 = vadd.f32 %v2669, %v2831
    %v2833 = vpop.f32.mrb[0].mxu0
    %v2834 = vadd.f32 %v2669, %v2833
    %v2835 = vpop.f32.mrb[0].mxu0
    %v2836 = vpop.f32.mrb[0].mxu0
    %2837 = vdwg.mxu0
    %2838 = vst [vmem:[#allocation2] sm:$0xff] %v2709
    %2839 = vst [vmem:[#allocation2 + $0x8] sm:$0xff] %v2711
    %2840 = vst [vmem:[#allocation2 + $0x10] sm:$0xff] %v2750
    %2841 = vst [vmem:[#allocation2 + $0x18] sm:$0xff] %v2752
    %2842 = vst [vmem:[#allocation2 + $0x20] sm:$0xff] %v2791
    %2843 = vst [vmem:[#allocation2 + $0x28] sm:$0xff] %v2793
    %2844 = vst [vmem:[#allocation2 + $0x30] sm:$0xff] %v2832
    %2845 = vst [vmem:[#allocation2 + $0x38] sm:$0xff] %v2834
    // Predicated region
    $region38: #{tpu_custom_call.1} parent=1 // pred_check
      _
    $region39: #{tpu_custom_call.1} parent=1 // pred_check_branch
      %2847 = sbr.rel (0) target = $region41
    $region40: #{tpu_custom_call.1} parent=1 // pred_region
      %s2849 = ssub.s32 1024, 1024
      %2850 = vsyncadd [#allocation3], %s2849
      %s2852 = sshll.u32 [#allocation2], 4
      %s2853 = int_to_ptr.vmem [resolvable:$true] %s2852
      %2855 = dma.vmem_to_hbm [thread:$0]  %s2853, 1024, %s9, [#allocation3]
    $region41: #{tpu_custom_call.1} parent=1 // pred_fallthru
      _
    // Predicated region
    $region42: #{tpu_custom_call.1} parent=1 // pred_check
      _
    $region43: #{tpu_custom_call.1} parent=1 // pred_check_branch
      %2857 = sbr.rel (0) target = $region45
    $region44: #{tpu_custom_call.1} parent=1 // pred_region
      %2858 = dma.done [#allocation3], 1024
    $region45: #{tpu_custom_call.1} parent=1 // pred_fallthru
      _
    %2859 = vsyncpa [#allocation3], 1

</llo_original>
